<compile_context>
chip_gen: v6e
topology: v6e:2x2x1
jax: 0.10.0
libtpu: 0.0.40
codegen_flags: <defaults>
</compile_context>

<pallas_src>
import functools
import math

import jax
import jax.numpy as jnp
from jax.experimental import pallas as pl
from jax.experimental.pallas import tpu as pltpu  # noqa: F401  (kept for VMEM/SMEM use)

# --- small config (fields of ElectraConfig actually used by the forward) ----------
B, S = 2, 8                   # batch, seq_len
VOCAB = 32                    # config.vocab_size (padding_idx = VOCAB-1, init only)
EMB = 32                      # config.embedding_size == config.hidden_size
HID = 32
HEADS = 2
DH = HID // HEADS
INTER = 64                    # config.intermediate_size
NLAB = 2                      # config.num_labels
MAXPOS = 64                   # config.max_position_embeddings
LN_EPS = 1e-12
POS_EMBEDDING = "exact_sine"  # exercises PositionalEmbedding (sin/cos) branch
BS = B * S

# --- weight slab row offsets (all multiples of 8 -> clean sublane tiles) -----------
R_TOK, R_QKV, R_WO, R_WI, R_WO2, R_WC, R_WCLS = 0, 32, 64, 96, 128, 192, 224
W_ROWS, W_LANES = 256, 128

# --- vector slab row offsets --------------------------------------------------------
V_INVF, V_EMB_G, V_EMB_B, V_BQKV, V_BO = 0, 1, 2, 3, 4
V_ATT_G, V_ATT_B, V_BI, V_BO2, V_FFN_G, V_FFN_B, V_BC, V_BCLS = 5, 6, 7, 8, 9, 10, 11, 12
V_SEL, V_POS, V_BD = 14, 16, 32
V_ROWS = 48


def _layer_norm(x, g, b):
    mu = jnp.mean(x, axis=-1, keepdims=True)
    var = jnp.mean((x - mu) ** 2, axis=-1, keepdims=True)
    return (x - mu) * jax.lax.rsqrt(var + LN_EPS) * g + b


# ----------------------------------------------------------------------------------
# Single fused kernel: whole ElectraDiscriminator forward.
# ----------------------------------------------------------------------------------
def _electra_fused_kernel(data_ref, mask_ref, w_ref, v_ref, out_ref):
    f32 = jnp.float32
    NEG = jnp.finfo(f32).min

    ids = data_ref[:, 0:1]        # [BS,1] token ids (exact small ints as f32)
    freq = data_ref[:, 1:2]       # [BS,1] frequencies
    labels = data_ref[0:B, 2:3]   # [B,1]  labels (exact small ints as f32)

    # ---- 1. token embedding lookup (gather as one-hot matmul, VOCAB=32) ---------------
    vocab_iota = jax.lax.broadcasted_iota(jnp.int32, (BS, VOCAB), 1).astype(f32)
    onehot_tok = (ids == vocab_iota).astype(f32)                               # [BS,VOCAB]
    word = jnp.dot(onehot_tok, w_ref[R_TOK:R_TOK + VOCAB, 0:EMB],
                   preferred_element_type=f32)                                 # [BS,EMB]

    # ---- 2. exact_sine positional embedding: (freq+1) outer inv_freq, sin|cos ---------
    lane_iota = jax.lax.broadcasted_iota(jnp.int32, (BS, EMB), 1)
    angle = (freq + 1.0) * v_ref[V_INVF:V_INVF + 1, 0:EMB]                     # [BS,EMB]
    pe = jnp.where(lane_iota < (EMB // 2), jnp.sin(angle), jnp.cos(angle))

    # ---- 3. ElectraEmbeddings: + token_type(0) + absolute pos emb, LayerNorm ----------
    x = _layer_norm(word + pe + v_ref[V_POS:V_POS + BS, 0:EMB],
                    v_ref[V_EMB_G:V_EMB_G + 1, 0:EMB],
                    v_ref[V_EMB_B:V_EMB_B + 1, 0:EMB])                         # [BS,HID]

    # ---- 4. fused QKV projection -------------------------------------------------------
    qkv = jnp.dot(x, w_ref[R_QKV:R_QKV + HID, 0:3 * HID],
                  preferred_element_type=f32) + v_ref[V_BQKV:V_BQKV + 1, 0:3 * HID]

    # ---- 5. multi-head self-attention: per head, all batches at once via block-diag ----
    key_bias = jnp.broadcast_to((1.0 - mask_ref[...]) * NEG, (BS, BS))         # HF ext. mask
    bd = v_ref[V_BD:V_BD + BS, 0:BS]                                           # block-diag 0/1
    bias = jnp.where(bd > 0.5, key_bias, NEG)                                  # [BS,BS]
    scale = 1.0 / math.sqrt(DH)

    ctx_heads = []
    for h in range(HEADS):                                                     # HEADS == 2
        q = qkv[:, h * DH:(h + 1) * DH]                                        # [BS,DH]
        k = qkv[:, HID + h * DH:HID + (h + 1) * DH]
        v = qkv[:, 2 * HID + h * DH:2 * HID + (h + 1) * DH]
        s = jax.lax.dot_general(q, k, (((1,), (1,)), ((), ())),
                                preferred_element_type=f32) * scale + bias     # [BS,BS]
        s = s - jnp.max(s, axis=-1, keepdims=True)
        p = jnp.exp(s)
        p = p * pl.reciprocal(jnp.sum(p, axis=-1, keepdims=True), approx=True)
        ctx_heads.append(jnp.dot(p, v, preferred_element_type=f32))            # [BS,DH]
    ctx = jnp.concatenate(ctx_heads, axis=1)                                   # [BS,HID]

    # ---- 6. attention output projection + residual LayerNorm --------------------------
    attn_out = jnp.dot(ctx, w_ref[R_WO:R_WO + HID, 0:HID],
                       preferred_element_type=f32) + v_ref[V_BO:V_BO + 1, 0:HID]
    x1 = _layer_norm(attn_out + x,
                     v_ref[V_ATT_G:V_ATT_G + 1, 0:HID],
                     v_ref[V_ATT_B:V_ATT_B + 1, 0:HID])

    # ---- 7. feed-forward + residual LayerNorm ------------------------------------------
    h1 = jnp.dot(x1, w_ref[R_WI:R_WI + HID, 0:INTER],
                 preferred_element_type=f32) + v_ref[V_BI:V_BI + 1, 0:INTER]
    # TODO(synk): HF ELECTRA uses exact erf-GELU; tanh approximation used here.
    h1 = jax.nn.gelu(h1, approximate=True)
    ff = jnp.dot(h1, w_ref[R_WO2:R_WO2 + INTER, 0:HID],
                 preferred_element_type=f32) + v_ref[V_BO2:V_BO2 + 1, 0:HID]
    x2 = _layer_norm(ff + x1,
                     v_ref[V_FFN_G:V_FFN_G + 1, 0:HID],
                     v_ref[V_FFN_B:V_FFN_B + 1, 0:HID])

    # ---- 8. classification head on [CLS] via constant one-hot selection matmul ---------
    sel = v_ref[V_SEL:V_SEL + B, 0:BS]                                         # [B,BS]
    cls = jnp.dot(sel, x2, preferred_element_type=f32)                         # [B,HID]
    h2 = jax.nn.gelu(jnp.dot(cls, w_ref[R_WC:R_WC + HID, 0:HID],
                             preferred_element_type=f32)
                     + v_ref[V_BC:V_BC + 1, 0:HID], approximate=True)
    logits = jnp.dot(h2, w_ref[R_WCLS:R_WCLS + HID, 0:NLAB],
                     preferred_element_type=f32) + v_ref[V_BCLS:V_BCLS + 1, 0:NLAB]

    # ---- 9. Softmax(dim=1) scores + mean cross-entropy loss, one packed output --------
    m = jnp.max(logits, axis=1, keepdims=True)
    e = jnp.exp(logits - m)
    denom = jnp.sum(e, axis=1, keepdims=True)
    scores = e * pl.reciprocal(denom, approx=True)                             # [B,NLAB]
    logp = (logits - m) - jnp.log(denom)
    lab_iota = jax.lax.broadcasted_iota(jnp.int32, (B, NLAB), 1).astype(f32)
    onehot_lab = (labels == lab_iota).astype(f32)                              # [B,NLAB]
    nll = -jnp.sum(onehot_lab * logp, axis=1, keepdims=True)                   # [B,1]
    loss = jnp.mean(nll, keepdims=True)                                        # [1,1]
    out_ref[...] = jnp.concatenate([scores, jnp.broadcast_to(loss, (B, 2))], axis=1)


# ----------------------------------------------------------------------------------
# Parameters (deterministic init, shapes follow the module's __init__)
# ----------------------------------------------------------------------------------
def init_params(key):
    ks = jax.random.split(key, 12)

    def w(k, shape):
        return jax.random.normal(k, shape, jnp.float32) * 0.02

    return {
        "tok_emb": w(ks[0], (VOCAB, EMB)),      # self.embed_layer.weight (= embeddings)
        "pos_emb": w(ks[1], (MAXPOS, EMB)),     # discriminator absolute pos embeddings
        "type_emb": w(ks[2], (2, EMB)),         # token_type embeddings
        "emb_ln_g": jnp.ones((EMB,), jnp.float32),
        "emb_ln_b": jnp.zeros((EMB,), jnp.float32),
        "wq": w(ks[3], (HID, HID)), "bq": jnp.zeros((HID,), jnp.float32),
        "wk": w(ks[4], (HID, HID)), "bk": jnp.zeros((HID,), jnp.float32),
        "wv": w(ks[5], (HID, HID)), "bv": jnp.zeros((HID,), jnp.float32),
        "wo": w(ks[6], (HID, HID)), "bo": jnp.zeros((HID,), jnp.float32),
        "attn_ln_g": jnp.ones((HID,), jnp.float32),
        "attn_ln_b": jnp.zeros((HID,), jnp.float32),
        "wi": w(ks[7], (HID, INTER)), "bi": jnp.zeros((INTER,), jnp.float32),
        "wo2": w(ks[8], (INTER, HID)), "bo2": jnp.zeros((HID,), jnp.float32),
        "ffn_ln_g": jnp.ones((HID,), jnp.float32),
        "ffn_ln_b": jnp.zeros((HID,), jnp.float32),
        "wc": w(ks[9], (HID, HID)), "bc": jnp.zeros((HID,), jnp.float32),
        "wcls": w(ks[10], (HID, NLAB)), "bcls": jnp.zeros((NLAB,), jnp.float32),
    }


def pack_params(p):
    """One-time packing into two lane-padded (128-lane) slabs: a stacked weight slab and
    a vector slab (biases/gains, inv_freq, pos+type, CLS selector, block-diag mask)."""
    def pad_w(a):
        return jnp.pad(a, ((0, 0), (0, W_LANES - a.shape[1])))

    w_slab = jnp.concatenate([
        pad_w(p["tok_emb"]),                                            # rows   0: 32
        pad_w(jnp.concatenate([p["wq"], p["wk"], p["wv"]], axis=1)),    # rows  32: 64
        pad_w(p["wo"]),                                                 # rows  64: 96
        pad_w(p["wi"]),                                                 # rows  96:128
        pad_w(p["wo2"]),                                                # rows 128:192
        pad_w(p["wc"]),                                                 # rows 192:224
        pad_w(p["wcls"]),                                               # rows 224:256
    ], axis=0)
    assert w_slab.shape == (W_ROWS, W_LANES)

    inv = 1.0 / (10000.0 ** (jnp.arange(0, EMB, 2, dtype=jnp.float32) / EMB))

    def row(vec):
        return jnp.pad(vec.reshape(1, -1), ((0, 0), (0, W_LANES - vec.size)))

    sel = jnp.zeros((B, BS), jnp.float32)
    for b in range(B):
        sel = sel.at[b, b * S].set(1.0)                                 # [CLS] selector

    pos_type = jnp.tile(p["pos_emb"][:S] + p["type_emb"][0][None, :], (B, 1))  # [BS,EMB]
    bd = jnp.kron(jnp.eye(B, dtype=jnp.float32), jnp.ones((S, S), jnp.float32))  # [BS,BS]

    v_slab = jnp.concatenate([
        row(jnp.concatenate([inv, inv])),                               # 0  inv_freq dup
        row(p["emb_ln_g"]), row(p["emb_ln_b"]),                         # 1,2
        row(jnp.concatenate([p["bq"], p["bk"], p["bv"]])),              # 3  fused qkv bias
        row(p["bo"]),                                                   # 4
        row(p["attn_ln_g"]), row(p["attn_ln_b"]),                       # 5,6
        row(p["bi"]), row(p["bo2"]),                                    # 7,8
        row(p["ffn_ln_g"]), row(p["ffn_ln_b"]),                         # 9,10
        row(p["bc"]), row(p["bcls"]),                                   # 11,12
        jnp.zeros((1, W_LANES), jnp.float32),                           # 13 pad
        jnp.pad(sel, ((0, 0), (0, W_LANES - BS))),                      # 14:16 CLS selector
        jnp.pad(pos_type, ((0, 0), (0, W_LANES - EMB))),                # 16:32 pos+type
        jnp.pad(bd, ((0, 0), (0, W_LANES - BS))),                       # 32:48 block-diag
    ], axis=0)
    assert v_slab.shape == (V_ROWS, W_LANES)

    return {"w_slab": w_slab, "v_slab": v_slab}


# ----------------------------------------------------------------------------------
# ElectraDiscriminator.forward(data, attention_mask, labels, pos_embedding, frequencies)
# (`pos_embedding` argument is unused in the torch code; self.pos_embedding is used)
# ----------------------------------------------------------------------------------
def electra_discriminator_forward(packed, token_ids, attention_mask, labels, frequencies):
    ids_col = token_ids.reshape(BS, 1).astype(jnp.float32)
    freq_col = frequencies.reshape(BS, 1).astype(jnp.float32)
    lab_col = jnp.zeros((BS, 1), jnp.float32).at[0:B, 0].set(labels.astype(jnp.float32))
    pad_col = jnp.zeros((BS, 1), jnp.float32)
    data = jnp.concatenate([ids_col, freq_col, lab_col, pad_col], axis=1)     # [BS,4]
    mask_row = attention_mask.reshape(1, BS).astype(jnp.float32)              # [1,BS]

    out = pl.pallas_call(
        _electra_fused_kernel,
        out_shape=jax.ShapeDtypeStruct((B, 2 + NLAB), jnp.float32),
    )(data, mask_row, packed["w_slab"], packed["v_slab"])

    loss = out[0, NLAB]            # loss replicated in lanes [NLAB:NLAB+2]
    scores = out[:, 0:NLAB]
    return loss, scores


if __name__ == "__main__":
    key = jax.random.PRNGKey(0)
    pkey, k1, k2, k3 = jax.random.split(key, 4)
    params = init_params(pkey)
    packed = pack_params(params)          # one-time weight packing (outside jit)

    token_ids = jax.random.randint(k1, (B, S), 0, VOCAB - 1)          # data
    attention_mask = jnp.ones((B, S), jnp.float32)                    # attention_mask
    labels = jax.random.randint(k2, (B,), 0, NLAB)                    # labels
    frequencies = jax.random.randint(k3, (B, S), 1, 20).astype(jnp.float32)

    fwd = jax.jit(functools.partial(electra_discriminator_forward, packed))
    loss, scores = fwd(token_ids, attention_mask, labels, frequencies)
    jax.block_until_ready((loss, scores))
    print("KERNEL_OK")
</pallas_src>

<mosaic_0001>
module attributes {stable_mosaic.version = 11 : i64} {
  func.func @_electra_fused_kernel(%arg0: memref<16x4xf32, #tpu.memory_space<vmem>>, %arg1: memref<1x16xf32, #tpu.memory_space<vmem>>, %arg2: memref<256x128xf32, #tpu.memory_space<vmem>>, %arg3: memref<48x128xf32, #tpu.memory_space<vmem>>, %arg4: memref<2x4xf32, #tpu.memory_space<vmem>>) attributes {dimension_semantics = [], scalar_prefetch = 0 : i64, scratch_operands = 0 : i64, tpu.core_type = #tpu.core_type<tc>} {
    %c0 = arith.constant 0 : index
    %c0_0 = arith.constant 0 : index
    %0 = vector.load %arg0[%c0, %c0_0] : memref<16x4xf32, #tpu.memory_space<vmem>>, vector<16x1xf32>
    %c0_1 = arith.constant 0 : index
    %c1 = arith.constant 1 : index
    %1 = vector.load %arg0[%c0_1, %c1] : memref<16x4xf32, #tpu.memory_space<vmem>>, vector<16x1xf32>
    %c0_2 = arith.constant 0 : index
    %c2 = arith.constant 2 : index
    %2 = vector.load %arg0[%c0_2, %c2] : memref<16x4xf32, #tpu.memory_space<vmem>>, vector<2x1xf32>
    %3 = tpu.iota {dimensions = array<i32: 1>} : vector<16x32xi32>
    %4 = arith.sitofp %3 : vector<16x32xi32> to vector<16x32xf32>
    %5 = vector.broadcast %0 : vector<16x1xf32> to vector<16x32xf32>
    %6 = arith.cmpf oeq, %5, %4 : vector<16x32xf32>
    %7 = arith.extui %6 : vector<16x32xi1> to vector<16x32xi32>
    %8 = arith.sitofp %7 : vector<16x32xi32> to vector<16x32xf32>
    %c0_3 = arith.constant 0 : index
    %c0_4 = arith.constant 0 : index
    %9 = vector.load %arg2[%c0_3, %c0_4] : memref<256x128xf32, #tpu.memory_space<vmem>>, vector<32x32xf32>
    %cst = arith.constant dense<0.000000e+00> : vector<16x32xf32>
    %10 = tpu.matmul %8, %9, %cst {dimension_numbers = #tpu.dot_dimension_numbers<[1], [0], [0], [1], [0, 0, 1, 1], [], []>} : vector<16x32xf32>, vector<32x32xf32>, vector<16x32xf32> -> vector<16x32xf32>
    %11 = tpu.iota {dimensions = array<i32: 1>} : vector<16x32xi32>
    %cst_5 = arith.constant 1.000000e+00 : f32
    %12 = vector.broadcast %cst_5 : f32 to vector<16x1xf32>
    %13 = arith.addf %1, %12 : vector<16x1xf32>
    %c0_6 = arith.constant 0 : index
    %c0_7 = arith.constant 0 : index
    %14 = vector.load %arg3[%c0_6, %c0_7] : memref<48x128xf32, #tpu.memory_space<vmem>>, vector<1x32xf32>
    %15 = vector.broadcast %13 : vector<16x1xf32> to vector<16x32xf32>
    %16 = vector.broadcast %14 : vector<1x32xf32> to vector<16x32xf32>
    %17 = arith.mulf %15, %16 : vector<16x32xf32>
    %c16_i32 = arith.constant 16 : i32
    %18 = vector.broadcast %c16_i32 : i32 to vector<16x32xi32>
    %19 = arith.cmpi slt, %11, %18 : vector<16x32xi32>
    %20 = math.sin %17 : vector<16x32xf32>
    %21 = math.cos %17 : vector<16x32xf32>
    %22 = arith.select %19, %20, %21 : vector<16x32xi1>, vector<16x32xf32>
    %23 = arith.addf %10, %22 : vector<16x32xf32>
    %c16 = arith.constant 16 : index
    %c0_8 = arith.constant 0 : index
    %24 = vector.load %arg3[%c16, %c0_8] : memref<48x128xf32, #tpu.memory_space<vmem>>, vector<16x32xf32>
    %25 = arith.addf %23, %24 : vector<16x32xf32>
    %c1_9 = arith.constant 1 : index
    %c0_10 = arith.constant 0 : index
    %26 = vector.load %arg3[%c1_9, %c0_10] : memref<48x128xf32, #tpu.memory_space<vmem>>, vector<1x32xf32>
    %c2_11 = arith.constant 2 : index
    %c0_12 = arith.constant 0 : index
    %27 = vector.load %arg3[%c2_11, %c0_12] : memref<48x128xf32, #tpu.memory_space<vmem>>, vector<1x32xf32>
    %cst_13 = arith.constant dense<0.000000e+00> : vector<16xf32>
    %28 = vector.multi_reduction <add>, %25, %cst_13 [1] : vector<16x32xf32> to vector<16xf32>
    %29 = vector.shape_cast %28 : vector<16xf32> to vector<16x1xf32>
    %cst_14 = arith.constant 3.200000e+01 : f32
    %30 = vector.broadcast %cst_14 : f32 to vector<16x1xf32>
    %31 = arith.divf %29, %30 : vector<16x1xf32>
    %32 = vector.broadcast %31 : vector<16x1xf32> to vector<16x32xf32>
    %33 = arith.subf %25, %32 : vector<16x32xf32>
    %34 = arith.mulf %33, %33 : vector<16x32xf32>
    %cst_15 = arith.constant dense<0.000000e+00> : vector<16xf32>
    %35 = vector.multi_reduction <add>, %34, %cst_15 [1] : vector<16x32xf32> to vector<16xf32>
    %36 = vector.shape_cast %35 : vector<16xf32> to vector<16x1xf32>
    %cst_16 = arith.constant 3.200000e+01 : f32
    %37 = vector.broadcast %cst_16 : f32 to vector<16x1xf32>
    %38 = arith.divf %36, %37 : vector<16x1xf32>
    %39 = vector.broadcast %31 : vector<16x1xf32> to vector<16x32xf32>
    %40 = arith.subf %25, %39 : vector<16x32xf32>
    %cst_17 = arith.constant 9.99999996E-13 : f32
    %41 = vector.broadcast %cst_17 : f32 to vector<16x1xf32>
    %42 = arith.addf %38, %41 : vector<16x1xf32>
    %43 = math.rsqrt %42 : vector<16x1xf32>
    %44 = vector.broadcast %43 : vector<16x1xf32> to vector<16x32xf32>
    %45 = arith.mulf %40, %44 : vector<16x32xf32>
    %46 = vector.broadcast %26 : vector<1x32xf32> to vector<16x32xf32>
    %47 = arith.mulf %45, %46 : vector<16x32xf32>
    %48 = vector.broadcast %27 : vector<1x32xf32> to vector<16x32xf32>
    %49 = arith.addf %47, %48 : vector<16x32xf32>
    %c32 = arith.constant 32 : index
    %c0_18 = arith.constant 0 : index
    %50 = vector.load %arg2[%c32, %c0_18] : memref<256x128xf32, #tpu.memory_space<vmem>>, vector<32x96xf32>
    %cst_19 = arith.constant dense<0.000000e+00> : vector<16x96xf32>
    %51 = tpu.matmul %49, %50, %cst_19 {dimension_numbers = #tpu.dot_dimension_numbers<[1], [0], [0], [1], [0, 0, 1, 1], [], []>} : vector<16x32xf32>, vector<32x96xf32>, vector<16x96xf32> -> vector<16x96xf32>
    %c3 = arith.constant 3 : index
    %c0_20 = arith.constant 0 : index
    %52 = vector.load %arg3[%c3, %c0_20] : memref<48x128xf32, #tpu.memory_space<vmem>>, vector<1x96xf32>
    %53 = vector.broadcast %52 : vector<1x96xf32> to vector<16x96xf32>
    %54 = arith.addf %51, %53 : vector<16x96xf32>
    %c0_21 = arith.constant 0 : index
    %c0_22 = arith.constant 0 : index
    %55 = vector.load %arg1[%c0_21, %c0_22] : memref<1x16xf32, #tpu.memory_space<vmem>>, vector<1x16xf32>
    %cst_23 = arith.constant 1.000000e+00 : f32
    %56 = vector.broadcast %cst_23 : f32 to vector<1x16xf32>
    %57 = arith.subf %56, %55 : vector<1x16xf32>
    %cst_24 = arith.constant -3.40282347E+38 : f32
    %58 = vector.broadcast %cst_24 : f32 to vector<1x16xf32>
    %59 = arith.mulf %57, %58 : vector<1x16xf32>
    %60 = vector.shape_cast %59 : vector<1x16xf32> to vector<1x16xf32>
    %61 = vector.broadcast %60 : vector<1x16xf32> to vector<16x16xf32>
    %c32_25 = arith.constant 32 : index
    %c0_26 = arith.constant 0 : index
    %62 = vector.load %arg3[%c32_25, %c0_26] : memref<48x128xf32, #tpu.memory_space<vmem>>, vector<16x16xf32>
    %cst_27 = arith.constant 5.000000e-01 : f32
    %63 = vector.broadcast %cst_27 : f32 to vector<16x16xf32>
    %64 = arith.cmpf ogt, %62, %63 : vector<16x16xf32>
    %cst_28 = arith.constant -3.40282347E+38 : f32
    %65 = vector.broadcast %cst_28 : f32 to vector<16x16xf32>
    %66 = arith.select %64, %61, %65 : vector<16x16xi1>, vector<16x16xf32>
    %67 = vector.extract_strided_slice %54 {offsets = [0, 0], sizes = [16, 16], strides = [1, 1]} : vector<16x96xf32> to vector<16x16xf32>
    %68 = vector.extract_strided_slice %54 {offsets = [0, 32], sizes = [16, 16], strides = [1, 1]} : vector<16x96xf32> to vector<16x16xf32>
    %69 = vector.extract_strided_slice %54 {offsets = [0, 64], sizes = [16, 16], strides = [1, 1]} : vector<16x96xf32> to vector<16x16xf32>
    %cst_29 = arith.constant dense<0.000000e+00> : vector<16x16xf32>
    %70 = tpu.matmul %67, %68, %cst_29 {dimension_numbers = #tpu.dot_dimension_numbers<[1], [1], [0], [0], [0, 0, 1, 0], [], []>} : vector<16x16xf32>, vector<16x16xf32>, vector<16x16xf32> -> vector<16x16xf32>
    %cst_30 = arith.constant 2.500000e-01 : f32
    %71 = vector.broadcast %cst_30 : f32 to vector<16x16xf32>
    %72 = arith.mulf %70, %71 : vector<16x16xf32>
    %73 = arith.addf %72, %66 : vector<16x16xf32>
    %cst_31 = arith.constant dense<0xFF800000> : vector<16xf32>
    %74 = vector.multi_reduction <maximumf>, %73, %cst_31 [1] : vector<16x16xf32> to vector<16xf32>
    %75 = vector.shape_cast %74 : vector<16xf32> to vector<16x1xf32>
    %76 = vector.broadcast %75 : vector<16x1xf32> to vector<16x16xf32>
    %77 = arith.subf %73, %76 : vector<16x16xf32>
    %78 = math.exp %77 : vector<16x16xf32>
    %cst_32 = arith.constant dense<0.000000e+00> : vector<16xf32>
    %79 = vector.multi_reduction <add>, %78, %cst_32 [1] : vector<16x16xf32> to vector<16xf32>
    %80 = vector.shape_cast %79 : vector<16xf32> to vector<16x1xf32>
    %81 = tpu.reciprocal %80 {approx = true} : vector<16x1xf32> -> vector<16x1xf32>
    %82 = vector.broadcast %81 : vector<16x1xf32> to vector<16x16xf32>
    %83 = arith.mulf %78, %82 : vector<16x16xf32>
    %cst_33 = arith.constant dense<0.000000e+00> : vector<16x16xf32>
    %84 = tpu.matmul %83, %69, %cst_33 {dimension_numbers = #tpu.dot_dimension_numbers<[1], [0], [0], [1], [0, 0, 1, 1], [], []>} : vector<16x16xf32>, vector<16x16xf32>, vector<16x16xf32> -> vector<16x16xf32>
    %85 = vector.extract_strided_slice %54 {offsets = [0, 16], sizes = [16, 16], strides = [1, 1]} : vector<16x96xf32> to vector<16x16xf32>
    %86 = vector.extract_strided_slice %54 {offsets = [0, 48], sizes = [16, 16], strides = [1, 1]} : vector<16x96xf32> to vector<16x16xf32>
    %87 = vector.extract_strided_slice %54 {offsets = [0, 80], sizes = [16, 16], strides = [1, 1]} : vector<16x96xf32> to vector<16x16xf32>
    %cst_34 = arith.constant dense<0.000000e+00> : vector<16x16xf32>
    %88 = tpu.matmul %85, %86, %cst_34 {dimension_numbers = #tpu.dot_dimension_numbers<[1], [1], [0], [0], [0, 0, 1, 0], [], []>} : vector<16x16xf32>, vector<16x16xf32>, vector<16x16xf32> -> vector<16x16xf32>
    %cst_35 = arith.constant 2.500000e-01 : f32
    %89 = vector.broadcast %cst_35 : f32 to vector<16x16xf32>
    %90 = arith.mulf %88, %89 : vector<16x16xf32>
    %91 = arith.addf %90, %66 : vector<16x16xf32>
    %cst_36 = arith.constant dense<0xFF800000> : vector<16xf32>
    %92 = vector.multi_reduction <maximumf>, %91, %cst_36 [1] : vector<16x16xf32> to vector<16xf32>
    %93 = vector.shape_cast %92 : vector<16xf32> to vector<16x1xf32>
    %94 = vector.broadcast %93 : vector<16x1xf32> to vector<16x16xf32>
    %95 = arith.subf %91, %94 : vector<16x16xf32>
    %96 = math.exp %95 : vector<16x16xf32>
    %cst_37 = arith.constant dense<0.000000e+00> : vector<16xf32>
    %97 = vector.multi_reduction <add>, %96, %cst_37 [1] : vector<16x16xf32> to vector<16xf32>
    %98 = vector.shape_cast %97 : vector<16xf32> to vector<16x1xf32>
    %99 = tpu.reciprocal %98 {approx = true} : vector<16x1xf32> -> vector<16x1xf32>
    %100 = vector.broadcast %99 : vector<16x1xf32> to vector<16x16xf32>
    %101 = arith.mulf %96, %100 : vector<16x16xf32>
    %cst_38 = arith.constant dense<0.000000e+00> : vector<16x16xf32>
    %102 = tpu.matmul %101, %87, %cst_38 {dimension_numbers = #tpu.dot_dimension_numbers<[1], [0], [0], [1], [0, 0, 1, 1], [], []>} : vector<16x16xf32>, vector<16x16xf32>, vector<16x16xf32> -> vector<16x16xf32>
    %103 = tpu.concatenate %84, %102 in 1 : vector<16x16xf32>, vector<16x16xf32> -> vector<16x32xf32>
    %c64 = arith.constant 64 : index
    %c0_39 = arith.constant 0 : index
    %104 = vector.load %arg2[%c64, %c0_39] : memref<256x128xf32, #tpu.memory_space<vmem>>, vector<32x32xf32>
    %cst_40 = arith.constant dense<0.000000e+00> : vector<16x32xf32>
    %105 = tpu.matmul %103, %104, %cst_40 {dimension_numbers = #tpu.dot_dimension_numbers<[1], [0], [0], [1], [0, 0, 1, 1], [], []>} : vector<16x32xf32>, vector<32x32xf32>, vector<16x32xf32> -> vector<16x32xf32>
    %c4 = arith.constant 4 : index
    %c0_41 = arith.constant 0 : index
    %106 = vector.load %arg3[%c4, %c0_41] : memref<48x128xf32, #tpu.memory_space<vmem>>, vector<1x32xf32>
    %107 = vector.broadcast %106 : vector<1x32xf32> to vector<16x32xf32>
    %108 = arith.addf %105, %107 : vector<16x32xf32>
    %109 = arith.addf %108, %49 : vector<16x32xf32>
    %c5 = arith.constant 5 : index
    %c0_42 = arith.constant 0 : index
    %110 = vector.load %arg3[%c5, %c0_42] : memref<48x128xf32, #tpu.memory_space<vmem>>, vector<1x32xf32>
    %c6 = arith.constant 6 : index
    %c0_43 = arith.constant 0 : index
    %111 = vector.load %arg3[%c6, %c0_43] : memref<48x128xf32, #tpu.memory_space<vmem>>, vector<1x32xf32>
    %cst_44 = arith.constant dense<0.000000e+00> : vector<16xf32>
    %112 = vector.multi_reduction <add>, %109, %cst_44 [1] : vector<16x32xf32> to vector<16xf32>
    %113 = vector.shape_cast %112 : vector<16xf32> to vector<16x1xf32>
    %cst_45 = arith.constant 3.200000e+01 : f32
    %114 = vector.broadcast %cst_45 : f32 to vector<16x1xf32>
    %115 = arith.divf %113, %114 : vector<16x1xf32>
    %116 = vector.broadcast %115 : vector<16x1xf32> to vector<16x32xf32>
    %117 = arith.subf %109, %116 : vector<16x32xf32>
    %118 = arith.mulf %117, %117 : vector<16x32xf32>
    %cst_46 = arith.constant dense<0.000000e+00> : vector<16xf32>
    %119 = vector.multi_reduction <add>, %118, %cst_46 [1] : vector<16x32xf32> to vector<16xf32>
    %120 = vector.shape_cast %119 : vector<16xf32> to vector<16x1xf32>
    %cst_47 = arith.constant 3.200000e+01 : f32
    %121 = vector.broadcast %cst_47 : f32 to vector<16x1xf32>
    %122 = arith.divf %120, %121 : vector<16x1xf32>
    %123 = vector.broadcast %115 : vector<16x1xf32> to vector<16x32xf32>
    %124 = arith.subf %109, %123 : vector<16x32xf32>
    %cst_48 = arith.constant 9.99999996E-13 : f32
    %125 = vector.broadcast %cst_48 : f32 to vector<16x1xf32>
    %126 = arith.addf %122, %125 : vector<16x1xf32>
    %127 = math.rsqrt %126 : vector<16x1xf32>
    %128 = vector.broadcast %127 : vector<16x1xf32> to vector<16x32xf32>
    %129 = arith.mulf %124, %128 : vector<16x32xf32>
    %130 = vector.broadcast %110 : vector<1x32xf32> to vector<16x32xf32>
    %131 = arith.mulf %129, %130 : vector<16x32xf32>
    %132 = vector.broadcast %111 : vector<1x32xf32> to vector<16x32xf32>
    %133 = arith.addf %131, %132 : vector<16x32xf32>
    %c96 = arith.constant 96 : index
    %c0_49 = arith.constant 0 : index
    %134 = vector.load %arg2[%c96, %c0_49] : memref<256x128xf32, #tpu.memory_space<vmem>>, vector<32x64xf32>
    %cst_50 = arith.constant dense<0.000000e+00> : vector<16x64xf32>
    %135 = tpu.matmul %133, %134, %cst_50 {dimension_numbers = #tpu.dot_dimension_numbers<[1], [0], [0], [1], [0, 0, 1, 1], [], []>} : vector<16x32xf32>, vector<32x64xf32>, vector<16x64xf32> -> vector<16x64xf32>
    %c7 = arith.constant 7 : index
    %c0_51 = arith.constant 0 : index
    %136 = vector.load %arg3[%c7, %c0_51] : memref<48x128xf32, #tpu.memory_space<vmem>>, vector<1x64xf32>
    %137 = vector.broadcast %136 : vector<1x64xf32> to vector<16x64xf32>
    %138 = arith.addf %135, %137 : vector<16x64xf32>
    %139 = arith.mulf %138, %138 : vector<16x64xf32>
    %140 = arith.mulf %138, %139 : vector<16x64xf32>
    %cst_52 = arith.constant 4.471500e-02 : f32
    %141 = vector.broadcast %cst_52 : f32 to vector<16x64xf32>
    %142 = arith.mulf %141, %140 : vector<16x64xf32>
    %143 = arith.addf %138, %142 : vector<16x64xf32>
    %cst_53 = arith.constant 0.797884583 : f32
    %144 = vector.broadcast %cst_53 : f32 to vector<16x64xf32>
    %145 = arith.mulf %144, %143 : vector<16x64xf32>
    %146 = math.tanh %145 : vector<16x64xf32>
    %cst_54 = arith.constant 1.000000e+00 : f32
    %147 = vector.broadcast %cst_54 : f32 to vector<16x64xf32>
    %148 = arith.addf %147, %146 : vector<16x64xf32>
    %cst_55 = arith.constant 5.000000e-01 : f32
    %149 = vector.broadcast %cst_55 : f32 to vector<16x64xf32>
    %150 = arith.mulf %149, %148 : vector<16x64xf32>
    %151 = arith.mulf %138, %150 : vector<16x64xf32>
    %c128 = arith.constant 128 : index
    %c0_56 = arith.constant 0 : index
    %152 = vector.load %arg2[%c128, %c0_56] : memref<256x128xf32, #tpu.memory_space<vmem>>, vector<64x32xf32>
    %cst_57 = arith.constant dense<0.000000e+00> : vector<16x32xf32>
    %153 = tpu.matmul %151, %152, %cst_57 {dimension_numbers = #tpu.dot_dimension_numbers<[1], [0], [0], [1], [0, 0, 1, 1], [], []>} : vector<16x64xf32>, vector<64x32xf32>, vector<16x32xf32> -> vector<16x32xf32>
    %c8 = arith.constant 8 : index
    %c0_58 = arith.constant 0 : index
    %154 = vector.load %arg3[%c8, %c0_58] : memref<48x128xf32, #tpu.memory_space<vmem>>, vector<1x32xf32>
    %155 = vector.broadcast %154 : vector<1x32xf32> to vector<16x32xf32>
    %156 = arith.addf %153, %155 : vector<16x32xf32>
    %157 = arith.addf %156, %133 : vector<16x32xf32>
    %c9 = arith.constant 9 : index
    %c0_59 = arith.constant 0 : index
    %158 = vector.load %arg3[%c9, %c0_59] : memref<48x128xf32, #tpu.memory_space<vmem>>, vector<1x32xf32>
    %c10 = arith.constant 10 : index
    %c0_60 = arith.constant 0 : index
    %159 = vector.load %arg3[%c10, %c0_60] : memref<48x128xf32, #tpu.memory_space<vmem>>, vector<1x32xf32>
    %cst_61 = arith.constant dense<0.000000e+00> : vector<16xf32>
    %160 = vector.multi_reduction <add>, %157, %cst_61 [1] : vector<16x32xf32> to vector<16xf32>
    %161 = vector.shape_cast %160 : vector<16xf32> to vector<16x1xf32>
    %cst_62 = arith.constant 3.200000e+01 : f32
    %162 = vector.broadcast %cst_62 : f32 to vector<16x1xf32>
    %163 = arith.divf %161, %162 : vector<16x1xf32>
    %164 = vector.broadcast %163 : vector<16x1xf32> to vector<16x32xf32>
    %165 = arith.subf %157, %164 : vector<16x32xf32>
    %166 = arith.mulf %165, %165 : vector<16x32xf32>
    %cst_63 = arith.constant dense<0.000000e+00> : vector<16xf32>
    %167 = vector.multi_reduction <add>, %166, %cst_63 [1] : vector<16x32xf32> to vector<16xf32>
    %168 = vector.shape_cast %167 : vector<16xf32> to vector<16x1xf32>
    %cst_64 = arith.constant 3.200000e+01 : f32
    %169 = vector.broadcast %cst_64 : f32 to vector<16x1xf32>
    %170 = arith.divf %168, %169 : vector<16x1xf32>
    %171 = vector.broadcast %163 : vector<16x1xf32> to vector<16x32xf32>
    %172 = arith.subf %157, %171 : vector<16x32xf32>
    %cst_65 = arith.constant 9.99999996E-13 : f32
    %173 = vector.broadcast %cst_65 : f32 to vector<16x1xf32>
    %174 = arith.addf %170, %173 : vector<16x1xf32>
    %175 = math.rsqrt %174 : vector<16x1xf32>
    %176 = vector.broadcast %175 : vector<16x1xf32> to vector<16x32xf32>
    %177 = arith.mulf %172, %176 : vector<16x32xf32>
    %178 = vector.broadcast %158 : vector<1x32xf32> to vector<16x32xf32>
    %179 = arith.mulf %177, %178 : vector<16x32xf32>
    %180 = vector.broadcast %159 : vector<1x32xf32> to vector<16x32xf32>
    %181 = arith.addf %179, %180 : vector<16x32xf32>
    %c14 = arith.constant 14 : index
    %c0_66 = arith.constant 0 : index
    %182 = vector.load %arg3[%c14, %c0_66] : memref<48x128xf32, #tpu.memory_space<vmem>>, vector<2x16xf32>
    %cst_67 = arith.constant dense<0.000000e+00> : vector<2x32xf32>
    %183 = tpu.matmul %182, %181, %cst_67 {dimension_numbers = #tpu.dot_dimension_numbers<[1], [0], [0], [1], [0, 0, 1, 1], [], []>} : vector<2x16xf32>, vector<16x32xf32>, vector<2x32xf32> -> vector<2x32xf32>
    %c192 = arith.constant 192 : index
    %c0_68 = arith.constant 0 : index
    %184 = vector.load %arg2[%c192, %c0_68] : memref<256x128xf32, #tpu.memory_space<vmem>>, vector<32x32xf32>
    %cst_69 = arith.constant dense<0.000000e+00> : vector<2x32xf32>
    %185 = tpu.matmul %183, %184, %cst_69 {dimension_numbers = #tpu.dot_dimension_numbers<[1], [0], [0], [1], [0, 0, 1, 1], [], []>} : vector<2x32xf32>, vector<32x32xf32>, vector<2x32xf32> -> vector<2x32xf32>
    %c11 = arith.constant 11 : index
    %c0_70 = arith.constant 0 : index
    %186 = vector.load %arg3[%c11, %c0_70] : memref<48x128xf32, #tpu.memory_space<vmem>>, vector<1x32xf32>
    %187 = vector.broadcast %186 : vector<1x32xf32> to vector<2x32xf32>
    %188 = arith.addf %185, %187 : vector<2x32xf32>
    %189 = arith.mulf %188, %188 : vector<2x32xf32>
    %190 = arith.mulf %188, %189 : vector<2x32xf32>
    %cst_71 = arith.constant 4.471500e-02 : f32
    %191 = vector.broadcast %cst_71 : f32 to vector<2x32xf32>
    %192 = arith.mulf %191, %190 : vector<2x32xf32>
    %193 = arith.addf %188, %192 : vector<2x32xf32>
    %cst_72 = arith.constant 0.797884583 : f32
    %194 = vector.broadcast %cst_72 : f32 to vector<2x32xf32>
    %195 = arith.mulf %194, %193 : vector<2x32xf32>
    %196 = math.tanh %195 : vector<2x32xf32>
    %cst_73 = arith.constant 1.000000e+00 : f32
    %197 = vector.broadcast %cst_73 : f32 to vector<2x32xf32>
    %198 = arith.addf %197, %196 : vector<2x32xf32>
    %cst_74 = arith.constant 5.000000e-01 : f32
    %199 = vector.broadcast %cst_74 : f32 to vector<2x32xf32>
    %200 = arith.mulf %199, %198 : vector<2x32xf32>
    %201 = arith.mulf %188, %200 : vector<2x32xf32>
    %c224 = arith.constant 224 : index
    %c0_75 = arith.constant 0 : index
    %202 = vector.load %arg2[%c224, %c0_75] : memref<256x128xf32, #tpu.memory_space<vmem>>, vector<32x2xf32>
    %cst_76 = arith.constant dense<0.000000e+00> : vector<2x2xf32>
    %203 = tpu.matmul %201, %202, %cst_76 {dimension_numbers = #tpu.dot_dimension_numbers<[1], [0], [0], [1], [0, 0, 1, 1], [], []>} : vector<2x32xf32>, vector<32x2xf32>, vector<2x2xf32> -> vector<2x2xf32>
    %c12 = arith.constant 12 : index
    %c0_77 = arith.constant 0 : index
    %204 = vector.load %arg3[%c12, %c0_77] : memref<48x128xf32, #tpu.memory_space<vmem>>, vector<1x2xf32>
    %205 = vector.broadcast %204 : vector<1x2xf32> to vector<2x2xf32>
    %206 = arith.addf %203, %205 : vector<2x2xf32>
    %cst_78 = arith.constant dense<0xFF800000> : vector<2xf32>
    %207 = vector.multi_reduction <maximumf>, %206, %cst_78 [1] : vector<2x2xf32> to vector<2xf32>
    %208 = vector.shape_cast %207 : vector<2xf32> to vector<2x1xf32>
    %209 = vector.broadcast %208 : vector<2x1xf32> to vector<2x2xf32>
    %210 = arith.subf %206, %209 : vector<2x2xf32>
    %211 = math.exp %210 : vector<2x2xf32>
    %cst_79 = arith.constant dense<0.000000e+00> : vector<2xf32>
    %212 = vector.multi_reduction <add>, %211, %cst_79 [1] : vector<2x2xf32> to vector<2xf32>
    %213 = vector.shape_cast %212 : vector<2xf32> to vector<2x1xf32>
    %214 = tpu.reciprocal %213 {approx = true} : vector<2x1xf32> -> vector<2x1xf32>
    %215 = vector.broadcast %214 : vector<2x1xf32> to vector<2x2xf32>
    %216 = arith.mulf %211, %215 : vector<2x2xf32>
    %217 = vector.broadcast %208 : vector<2x1xf32> to vector<2x2xf32>
    %218 = arith.subf %206, %217 : vector<2x2xf32>
    %219 = math.log %213 : vector<2x1xf32>
    %220 = vector.broadcast %219 : vector<2x1xf32> to vector<2x2xf32>
    %221 = arith.subf %218, %220 : vector<2x2xf32>
    %222 = tpu.iota {dimensions = array<i32: 1>} : vector<2x2xi32>
    %223 = arith.sitofp %222 : vector<2x2xi32> to vector<2x2xf32>
    %224 = vector.broadcast %2 : vector<2x1xf32> to vector<2x2xf32>
    %225 = arith.cmpf oeq, %224, %223 : vector<2x2xf32>
    %226 = arith.extui %225 : vector<2x2xi1> to vector<2x2xi32>
    %227 = arith.sitofp %226 : vector<2x2xi32> to vector<2x2xf32>
    %228 = arith.mulf %227, %221 : vector<2x2xf32>
    %cst_80 = arith.constant dense<0.000000e+00> : vector<2xf32>
    %229 = vector.multi_reduction <add>, %228, %cst_80 [1] : vector<2x2xf32> to vector<2xf32>
    %230 = vector.shape_cast %229 : vector<2xf32> to vector<2x1xf32>
    %cst_81 = arith.constant 0.000000e+00 : f32
    %231 = vector.broadcast %cst_81 : f32 to vector<2x1xf32>
    %232 = arith.subf %231, %230 : vector<2x1xf32>
    %233 = vector.shape_cast %232 : vector<2x1xf32> to vector<1x2x1xf32>
    %cst_82 = arith.constant dense<0.000000e+00> : vector<1xf32>
    %234 = vector.multi_reduction <add>, %233, %cst_82 [1, 2] : vector<1x2x1xf32> to vector<1xf32>
    %235 = vector.shape_cast %234 : vector<1xf32> to vector<1x1x1xf32>
    %236 = vector.extract %235[0, 0, 0] : f32 from vector<1x1x1xf32>
    %237 = vector.broadcast %236 : f32 to vector<1x1xf32>
    %cst_83 = arith.constant 2.000000e+00 : f32
    %238 = vector.broadcast %cst_83 : f32 to vector<1x1xf32>
    %239 = arith.divf %237, %238 : vector<1x1xf32>
    %240 = vector.shape_cast %239 : vector<1x1xf32> to vector<1x1xf32>
    %241 = vector.broadcast %240 : vector<1x1xf32> to vector<2x2xf32>
    %242 = tpu.concatenate %216, %241 in 1 : vector<2x2xf32>, vector<2x2xf32> -> vector<2x4xf32>
    %c0_84 = arith.constant 0 : index
    %c0_85 = arith.constant 0 : index
    %243 = vector.load %arg4[%c0_84, %c0_85] : memref<2x4xf32, #tpu.memory_space<vmem>>, vector<2x4xf32>
    tpu.vector_store %arg4[%c0_84, %c0_85], %242 {strides = array<i32>} : memref<2x4xf32, #tpu.memory_space<vmem>>, vector<2x4xf32>,
    return
  }
}

</mosaic_0001>

<llo_original>
// kernel: electra_discriminator_forward.1
$region0: #{electra_discriminator_forward.1}
  #allocation0 [shape = 'u32[]', space=smem, size = 0x4, offset = 0x4, fixed_abs, tag = 'smem constant byte address 0x4 - core index']
  #allocation1 [shape = 'u32[144,128]{1,0:T(1,128)}', space=vmem, size = 0x12000, scoped, tag = 'internal scratch']
  %s0 = inlined_call_operand.vmem [shape: f32[16,4], index: 0, kind: input, shape index: {}]
  %s1 = inlined_call_operand.vmem [shape: f32[1,16], index: 1, kind: input, shape index: {}]
  %s2 = inlined_call_operand.hbm [shape: f32[256,128], index: 2, kind: input, shape index: {}]
  %s3 = inlined_call_operand.vmem [shape: f32[48,128], index: 3, kind: input, shape index: {}]
  %s4 = inlined_call_operand.vmem [shape: f32[2,4], index: 4, kind: output, shape index: {}]
  %s5 = sld [smem:[#allocation0]]
  $region30: #{electra_discriminator_forward.1} parent=0
    _
  %s7 = ssub.s32 1, %s5
  %s8 = scalar_select 0, %s7, %s5
  $region1: #{electra_discriminator_forward.1} parent=0
    #allocation2 [shape = 'u8[131072]{0}', space=vmem, size = 0x20000, scoped, tag = 'input window, operand 2, single buffered']
    #allocation3 [shape = 's32[1]{0}', space=sflag, size = 0x4, scoped, tag = 'scoped memory for electra_discriminator_forward.1']
    %9 = vsyncpa [#allocation3], 0
    // Predicated region
    $region2: #{electra_discriminator_forward.1} parent=1 // pred_check
      _
    $region3: #{electra_discriminator_forward.1} parent=1 // pred_check_branch
      %11 = sbr.rel (0) target = $region5
    $region4: #{electra_discriminator_forward.1} parent=1 // pred_region
      _
    $region5: #{electra_discriminator_forward.1} parent=1 // pred_fallthru
      _
    // Predicated region
    $region6: #{electra_discriminator_forward.1} parent=1 // pred_check
      _
    $region7: #{electra_discriminator_forward.1} parent=1 // pred_check_branch
      %13 = sbr.rel (0) target = $region9
    $region8: #{electra_discriminator_forward.1} parent=1 // pred_region
      _
    $region9: #{electra_discriminator_forward.1} parent=1 // pred_fallthru
      _
    // Predicated region
    $region10: #{electra_discriminator_forward.1} parent=1 // pred_check
      _
    $region11: #{electra_discriminator_forward.1} parent=1 // pred_check_branch
      %15 = sbr.rel (0) target = $region13
    $region12: #{electra_discriminator_forward.1} parent=1 // pred_region
      %s17 = ssub.s32 4096, 4096
      %18 = vsyncadd [#allocation3], %s17
      %s19 = sshll.u32 [#allocation2], 4
      %s20 = int_to_ptr.vmem [resolvable:$true] %s19
      %25 = dma.hbm_to_vmem [thread:$0]  %s2, 4096, %s20, [#allocation3], 128, 128, 8
    $region13: #{electra_discriminator_forward.1} parent=1 // pred_fallthru
      _
    // Predicated region
    $region14: #{electra_discriminator_forward.1} parent=1 // pred_check
      _
    $region15: #{electra_discriminator_forward.1} parent=1 // pred_check_branch
      %27 = sbr.rel (0) target = $region17
    $region16: #{electra_discriminator_forward.1} parent=1 // pred_region
      _
    $region17: #{electra_discriminator_forward.1} parent=1 // pred_fallthru
      _
    // Predicated region
    $region18: #{electra_discriminator_forward.1} parent=1 // pred_check
      _
    $region19: #{electra_discriminator_forward.1} parent=1 // pred_check_branch
      %29 = sbr.rel (0) target = $region21
    $region20: #{electra_discriminator_forward.1} parent=1 // pred_region
      %30 = dma.done [#allocation3], 4096
    $region21: #{electra_discriminator_forward.1} parent=1 // pred_fallthru
      _
    %v31 = vld [vmem:[%s0] sm:$0xff]
    %v32 = vld [vmem:[%s0 + $0x8] sm:$0xff]
    %v33 = vld [vmem:[%s0] sm:$0x3]
    %v34 = vlaneseq
    %v35 = vand.u32 %v34, 127
    %v36 = vcvt.s32.f32 %v35
    %38 = vset.pattern.permute.xlu0 0
    %39 = vperm.xlu0 %38, %v31
    %v40 = vpop.permute.xlu0 %39
    %43 = vset.pattern.permute.xlu0 0
    %44 = vperm.xlu0 %43, %v32
    %v45 = vpop.permute.xlu0 %44
    %vm47 = vcmp.eq.f32.partialorder %v40, %v36
    %vm48 = vcmp.eq.f32.partialorder %v45, %v36
    %v49 = vsel %vm47, 1, 0
    %v50 = vsel %vm48, 1, 0
    %v51 = vcvt.s32.f32 %v49
    %v52 = vcvt.s32.f32 %v50
    %v53 = vld [vmem:[#allocation2] sm:$0xff]
    %v54 = vld [vmem:[#allocation2 + $0x8] sm:$0xff]
    %v55 = vld [vmem:[#allocation2 + $0x10] sm:$0xff]
    %v56 = vld [vmem:[#allocation2 + $0x18] sm:$0xff]
    %v57 = vadd.f32 %v31, 1.0
    %v58 = vadd.f32 %v32, 1.0
    %v59 = vld [vmem:[%s3] sm:$0x1]
    %61 = vset.pattern.permute.xlu0 1
    %62 = vperm.xlu0 %61, %v57
    %v63 = vpop.permute.xlu0 %62
    %66 = vset.pattern.permute.xlu0 1
    %67 = vperm.xlu0 %66, %v58
    %v68 = vpop.permute.xlu0 %67
    %v70 = vlaneseq
    %v71 = vshrl.u32 %v70, 7
    %v72 = vsub.s32 0, %v71
    %v73 = vrot.slane %v59, %v72
    %v74 = vmul.f32 %v63, %v73
    %v75 = vmul.f32 %v68, %v73
    %vm76 = vcmp.lt.s32.totalorder %v35, 16
    %v77 = vand.u32 2147483647, %v74
    %vm78 = vcmp.le.f32.partialorder %v77, 0.7853982
    %vm79 = vcmp.lt.s32.totalorder %v74, 0
    %v80 = vand.u32 %v74, 2139095040
    %v81 = vshrl.u32 %v80, 23
    %v82 = vsub.s32 %v81, 127
    %v83 = vand.u32 2147483647, %v74
    %v84 = vand.u32 %v83, 8388607
    %v85 = vor.u32 %v84, 8388608
    %v86 = vsub.s32 0, %v85
    %v87 = vadd.s32 %v82, 1
    %vm88 = vcmp.gt.s32.totalorder %v87, 0
    %v89 = vsel %vm88, %v87, 0
    %v90 = vshrl.u32 %v89, 5
    %v91 = vand.u32 %v89, 31
    %v92 = vsub.s32 32, %v91
    %v93 = vshrl.u32 683565275, %v92
    %v94 = vshll.u32 683565275, %v91
    %v95 = vshrl.u32 2475754826, %v92
    %v96 = vor.u32 %v94, %v95
    %v97 = vshll.u32 2475754826, %v91
    %v98 = vshrl.u32 2131351028, %v92
    %v99 = vor.u32 %v97, %v98
    %v100 = vshll.u32 2131351028, %v91
    %v101 = vshrl.u32 2102212464, %v92
    %v102 = vor.u32 %v100, %v101
    %v103 = vshll.u32 2102212464, %v91
    %v104 = vshrl.u32 920167782, %v92
    %v105 = vor.u32 %v103, %v104
    %v106 = vshll.u32 920167782, %v91
    %v107 = vshrl.u32 1326507024, %v92
    %v108 = vor.u32 %v106, %v107
    %vm109 = vcmp.lt.s32.totalorder %v90, 1
    %vm110 = vcmp.lt.s32.totalorder %v90, 2
    %vm111 = vcmp.lt.s32.totalorder %v90, 3
    %vm112 = vcmp.lt.s32.totalorder %v90, 4
    %v113 = vsel %vm109, %v93, %v96
    %v114 = vsel %vm112, %v102, 2102212464
    %v115 = vsel %vm111, %v99, %v114
    %v116 = vsel %vm110, %v113, %v115
    %v117 = vsel %vm109, %v96, %v99
    %v118 = vsel %vm112, %v105, 920167782
    %v119 = vsel %vm111, %v102, %v118
    %v120 = vsel %vm110, %v117, %v119
    %v121 = vsel %vm109, %v99, %v102
    %v122 = vsel %vm112, %v108, 1326507024
    %v123 = vsel %vm111, %v105, %v122
    %v124 = vsel %vm110, %v121, %v123
    %v125 = vshll.u32 %v85, 8
    %v126 = vmul.u32.u64.compose %v125, %v124
    %v127 = vextract.low.u32 %v126
    %v128 = vextract.high.u32 %v126
    %v129 = vmul.u32.u64.compose %v125, %v120
    %v130 = vextract.low.u32 %v129
    %v131 = vextract.high.u32 %v129
    %v132 = vmul.u32 %v125, %v116
    %v133 = vadd.s32 %v128, %v130
    %vm134 = vc.u32 %v128, %v130
    %v135 = vadd.s32 %v131, 1
    %v136 = vsel %vm134, %v135, %v131
    %v137 = vadd.s32 %v132, %v136
    %v138 = vadd.s32 %v137, 536870912
    %v139 = vshrl.u32 %v138, 30
    %v140 = vshll.u32 %v139, 30
    %v141 = vsub.s32 %v137, %v140
    %vm142 = vcmp.lt.s32.totalorder %v141, 0
    %v143 = vsub.s32 0, %v141
    %v144 = vsel %vm142, %v143, %v141
    %v145 = vclz %v144
    %v146 = vsub.s32 %v145, 2
    %vm147 = vcmp.gt.s32.totalorder 0, %v146
    %v148 = vsel %vm147, 0, %v146
    %v149 = vsub.s32 32, %v148
    %v150 = vshll.u32 %v141, %v148
    %v151 = vshrl.u32 %v133, %v149
    %v152 = vor.u32 %v150, %v151
    %v153 = vsub.s32 4294967266, %v148
    %v154 = vadd.s32 %v153, 127
    %v155 = vshll.u32 %v154, 23
    %v156 = vor.u32 4788187, %v155
    %v157 = vand.u32 2147483647, %v156
    %v159 = vcvt.s32.f32 %v152
    %v160 = vmul.f32 %v159, %v157
    %v161 = vxor.u32 %v160, 2147483648
    %v162 = vsel %vm79, %v161, %v160
    %v163 = vsub.s32 4, %v139
    %v164 = vsel %vm79, %v163, %v139
    %v165 = vsel %vm78, %v74, %v162
    %v166 = vsel %vm78, 0, %v164
    %v167 = vcosq.f32.pop %v165
    %v168 = vsinq.f32.pop %v165
    %vm169 = vweird.f32 %v74
    %v170 = vadd.s32 %v166, 3
    %v171 = vand.u32 %v170, 3
    %vm172 = vcmp.lt.s32.totalorder %v171, 2
    %vm173 = vcmp.eq.s32.totalorder %v171, 0
    %v174 = vxor.u32 %v168, 2147483648
    %v175 = vsel %vm173, %v167, %v174
    %vm176 = vcmp.eq.s32.totalorder %v171, 2
    %v177 = vxor.u32 %v167, 2147483648
    %v178 = vsel %vm176, %v177, %v168
    %v179 = vsel %vm172, %v175, %v178
    %v180 = vsel %vm169, nan, %v179
    %v181 = vand.u32 2147483647, %v75
    %vm182 = vcmp.le.f32.partialorder %v181, 0.7853982
    %vm183 = vcmp.lt.s32.totalorder %v75, 0
    %v184 = vand.u32 %v75, 2139095040
    %v185 = vshrl.u32 %v184, 23
    %v186 = vsub.s32 %v185, 127
    %v187 = vand.u32 2147483647, %v75
    %v188 = vand.u32 %v187, 8388607
    %v189 = vor.u32 %v188, 8388608
    %v190 = vsub.s32 0, %v189
    %v191 = vadd.s32 %v186, 1
    %vm192 = vcmp.gt.s32.totalorder %v191, 0
    %v193 = vsel %vm192, %v191, 0
    %v194 = vshrl.u32 %v193, 5
    %v195 = vand.u32 %v193, 31
    %v196 = vsub.s32 32, %v195
    %v197 = vshrl.u32 683565275, %v196
    %v198 = vshll.u32 683565275, %v195
    %v199 = vshrl.u32 2475754826, %v196
    %v200 = vor.u32 %v198, %v199
    %v201 = vshll.u32 2475754826, %v195
    %v202 = vshrl.u32 2131351028, %v196
    %v203 = vor.u32 %v201, %v202
    %v204 = vshll.u32 2131351028, %v195
    %v205 = vshrl.u32 2102212464, %v196
    %v206 = vor.u32 %v204, %v205
    %v207 = vshll.u32 2102212464, %v195
    %v208 = vshrl.u32 920167782, %v196
    %v209 = vor.u32 %v207, %v208
    %v210 = vshll.u32 920167782, %v195
    %v211 = vshrl.u32 1326507024, %v196
    %v212 = vor.u32 %v210, %v211
    %vm213 = vcmp.lt.s32.totalorder %v194, 1
    %vm214 = vcmp.lt.s32.totalorder %v194, 2
    %vm215 = vcmp.lt.s32.totalorder %v194, 3
    %vm216 = vcmp.lt.s32.totalorder %v194, 4
    %v217 = vsel %vm213, %v197, %v200
    %v218 = vsel %vm216, %v206, 2102212464
    %v219 = vsel %vm215, %v203, %v218
    %v220 = vsel %vm214, %v217, %v219
    %v221 = vsel %vm213, %v200, %v203
    %v222 = vsel %vm216, %v209, 920167782
    %v223 = vsel %vm215, %v206, %v222
    %v224 = vsel %vm214, %v221, %v223
    %v225 = vsel %vm213, %v203, %v206
    %v226 = vsel %vm216, %v212, 1326507024
    %v227 = vsel %vm215, %v209, %v226
    %v228 = vsel %vm214, %v225, %v227
    %v229 = vshll.u32 %v189, 8
    %v230 = vmul.u32.u64.compose %v229, %v228
    %v231 = vextract.low.u32 %v230
    %v232 = vextract.high.u32 %v230
    %v233 = vmul.u32.u64.compose %v229, %v224
    %v234 = vextract.low.u32 %v233
    %v235 = vextract.high.u32 %v233
    %v236 = vmul.u32 %v229, %v220
    %v237 = vadd.s32 %v232, %v234
    %vm238 = vc.u32 %v232, %v234
    %v239 = vadd.s32 %v235, 1
    %v240 = vsel %vm238, %v239, %v235
    %v241 = vadd.s32 %v236, %v240
    %v242 = vadd.s32 %v241, 536870912
    %v243 = vshrl.u32 %v242, 30
    %v244 = vshll.u32 %v243, 30
    %v245 = vsub.s32 %v241, %v244
    %vm246 = vcmp.lt.s32.totalorder %v245, 0
    %v247 = vsub.s32 0, %v245
    %v248 = vsel %vm246, %v247, %v245
    %v249 = vclz %v248
    %v250 = vsub.s32 %v249, 2
    %vm251 = vcmp.gt.s32.totalorder 0, %v250
    %v252 = vsel %vm251, 0, %v250
    %v253 = vsub.s32 32, %v252
    %v254 = vshll.u32 %v245, %v252
    %v255 = vshrl.u32 %v237, %v253
    %v256 = vor.u32 %v254, %v255
    %v257 = vsub.s32 4294967266, %v252
    %v258 = vadd.s32 %v257, 127
    %v259 = vshll.u32 %v258, 23
    %v260 = vor.u32 4788187, %v259
    %v261 = vand.u32 2147483647, %v260
    %v263 = vcvt.s32.f32 %v256
    %v264 = vmul.f32 %v263, %v261
    %v265 = vxor.u32 %v264, 2147483648
    %v266 = vsel %vm183, %v265, %v264
    %v267 = vsub.s32 4, %v243
    %v268 = vsel %vm183, %v267, %v243
    %v269 = vsel %vm182, %v75, %v266
    %v270 = vsel %vm182, 0, %v268
    %v271 = vcosq.f32.pop %v269
    %v272 = vsinq.f32.pop %v269
    %vm273 = vweird.f32 %v75
    %v274 = vadd.s32 %v270, 3
    %v275 = vand.u32 %v274, 3
    %vm276 = vcmp.lt.s32.totalorder %v275, 2
    %vm277 = vcmp.eq.s32.totalorder %v275, 0
    %v278 = vxor.u32 %v272, 2147483648
    %v279 = vsel %vm277, %v271, %v278
    %vm280 = vcmp.eq.s32.totalorder %v275, 2
    %v281 = vxor.u32 %v271, 2147483648
    %v282 = vsel %vm280, %v281, %v272
    %v283 = vsel %vm276, %v279, %v282
    %v284 = vsel %vm273, nan, %v283
    %v285 = vand.u32 2147483647, %v74
    %vm286 = vcmp.le.f32.partialorder %v285, 0.7853982
    %vm287 = vcmp.lt.s32.totalorder %v74, 0
    %v288 = vand.u32 %v74, 2139095040
    %v289 = vshrl.u32 %v288, 23
    %v290 = vsub.s32 %v289, 127
    %v291 = vand.u32 2147483647, %v74
    %v292 = vand.u32 %v291, 8388607
    %v293 = vor.u32 %v292, 8388608
    %v294 = vsub.s32 0, %v293
    %v295 = vadd.s32 %v290, 1
    %vm296 = vcmp.gt.s32.totalorder %v295, 0
    %v297 = vsel %vm296, %v295, 0
    %v298 = vshrl.u32 %v297, 5
    %v299 = vand.u32 %v297, 31
    %v300 = vsub.s32 32, %v299
    %v301 = vshrl.u32 683565275, %v300
    %v302 = vshll.u32 683565275, %v299
    %v303 = vshrl.u32 2475754826, %v300
    %v304 = vor.u32 %v302, %v303
    %v305 = vshll.u32 2475754826, %v299
    %v306 = vshrl.u32 2131351028, %v300
    %v307 = vor.u32 %v305, %v306
    %v308 = vshll.u32 2131351028, %v299
    %v309 = vshrl.u32 2102212464, %v300
    %v310 = vor.u32 %v308, %v309
    %v311 = vshll.u32 2102212464, %v299
    %v312 = vshrl.u32 920167782, %v300
    %v313 = vor.u32 %v311, %v312
    %v314 = vshll.u32 920167782, %v299
    %v315 = vshrl.u32 1326507024, %v300
    %v316 = vor.u32 %v314, %v315
    %vm317 = vcmp.lt.s32.totalorder %v298, 1
    %vm318 = vcmp.lt.s32.totalorder %v298, 2
    %vm319 = vcmp.lt.s32.totalorder %v298, 3
    %vm320 = vcmp.lt.s32.totalorder %v298, 4
    %v321 = vsel %vm317, %v301, %v304
    %v322 = vsel %vm320, %v310, 2102212464
    %v323 = vsel %vm319, %v307, %v322
    %v324 = vsel %vm318, %v321, %v323
    %v325 = vsel %vm317, %v304, %v307
    %v326 = vsel %vm320, %v313, 920167782
    %v327 = vsel %vm319, %v310, %v326
    %v328 = vsel %vm318, %v325, %v327
    %v329 = vsel %vm317, %v307, %v310
    %v330 = vsel %vm320, %v316, 1326507024
    %v331 = vsel %vm319, %v313, %v330
    %v332 = vsel %vm318, %v329, %v331
    %v333 = vshll.u32 %v293, 8
    %v334 = vmul.u32.u64.compose %v333, %v332
    %v335 = vextract.low.u32 %v334
    %v336 = vextract.high.u32 %v334
    %v337 = vmul.u32.u64.compose %v333, %v328
    %v338 = vextract.low.u32 %v337
    %v339 = vextract.high.u32 %v337
    %v340 = vmul.u32 %v333, %v324
    %v341 = vadd.s32 %v336, %v338
    %vm342 = vc.u32 %v336, %v338
    %v343 = vadd.s32 %v339, 1
    %v344 = vsel %vm342, %v343, %v339
    %v345 = vadd.s32 %v340, %v344
    %v346 = vadd.s32 %v345, 536870912
    %v347 = vshrl.u32 %v346, 30
    %v348 = vshll.u32 %v347, 30
    %v349 = vsub.s32 %v345, %v348
    %vm350 = vcmp.lt.s32.totalorder %v349, 0
    %v351 = vsub.s32 0, %v349
    %v352 = vsel %vm350, %v351, %v349
    %v353 = vclz %v352
    %v354 = vsub.s32 %v353, 2
    %vm355 = vcmp.gt.s32.totalorder 0, %v354
    %v356 = vsel %vm355, 0, %v354
    %v357 = vsub.s32 32, %v356
    %v358 = vshll.u32 %v349, %v356
    %v359 = vshrl.u32 %v341, %v357
    %v360 = vor.u32 %v358, %v359
    %v361 = vsub.s32 4294967266, %v356
    %v362 = vadd.s32 %v361, 127
    %v363 = vshll.u32 %v362, 23
    %v364 = vor.u32 4788187, %v363
    %v365 = vand.u32 2147483647, %v364
    %v367 = vcvt.s32.f32 %v360
    %v368 = vmul.f32 %v367, %v365
    %v369 = vxor.u32 %v368, 2147483648
    %v370 = vsel %vm287, %v369, %v368
    %v371 = vsub.s32 4, %v347
    %v372 = vsel %vm287, %v371, %v347
    %v373 = vsel %vm286, %v74, %v370
    %v374 = vsel %vm286, 0, %v372
    %v375 = vcosq.f32.pop %v373
    %v376 = vsinq.f32.pop %v373
    %vm377 = vweird.f32 %v74
    %v378 = vand.u32 %v374, 3
    %vm379 = vcmp.lt.s32.totalorder %v378, 2
    %vm380 = vcmp.eq.s32.totalorder %v378, 0
    %v381 = vxor.u32 %v376, 2147483648
    %v382 = vsel %vm380, %v375, %v381
    %vm383 = vcmp.eq.s32.totalorder %v378, 2
    %v384 = vxor.u32 %v375, 2147483648
    %v385 = vsel %vm383, %v384, %v376
    %v386 = vsel %vm379, %v382, %v385
    %v387 = vsel %vm377, nan, %v386
    %v388 = vand.u32 2147483647, %v75
    %vm389 = vcmp.le.f32.partialorder %v388, 0.7853982
    %vm390 = vcmp.lt.s32.totalorder %v75, 0
    %v391 = vand.u32 %v75, 2139095040
    %v392 = vshrl.u32 %v391, 23
    %v393 = vsub.s32 %v392, 127
    %v394 = vand.u32 2147483647, %v75
    %v395 = vand.u32 %v394, 8388607
    %v396 = vor.u32 %v395, 8388608
    %v397 = vsub.s32 0, %v396
    %v398 = vadd.s32 %v393, 1
    %vm399 = vcmp.gt.s32.totalorder %v398, 0
    %v400 = vsel %vm399, %v398, 0
    %v401 = vshrl.u32 %v400, 5
    %v402 = vand.u32 %v400, 31
    %v403 = vsub.s32 32, %v402
    %v404 = vshrl.u32 683565275, %v403
    %v405 = vshll.u32 683565275, %v402
    %v406 = vshrl.u32 2475754826, %v403
    %v407 = vor.u32 %v405, %v406
    %v408 = vshll.u32 2475754826, %v402
    %v409 = vshrl.u32 2131351028, %v403
    %v410 = vor.u32 %v408, %v409
    %v411 = vshll.u32 2131351028, %v402
    %v412 = vshrl.u32 2102212464, %v403
    %v413 = vor.u32 %v411, %v412
    %v414 = vshll.u32 2102212464, %v402
    %v415 = vshrl.u32 920167782, %v403
    %v416 = vor.u32 %v414, %v415
    %v417 = vshll.u32 920167782, %v402
    %v418 = vshrl.u32 1326507024, %v403
    %v419 = vor.u32 %v417, %v418
    %vm420 = vcmp.lt.s32.totalorder %v401, 1
    %vm421 = vcmp.lt.s32.totalorder %v401, 2
    %vm422 = vcmp.lt.s32.totalorder %v401, 3
    %vm423 = vcmp.lt.s32.totalorder %v401, 4
    %v424 = vsel %vm420, %v404, %v407
    %v425 = vsel %vm423, %v413, 2102212464
    %v426 = vsel %vm422, %v410, %v425
    %v427 = vsel %vm421, %v424, %v426
    %v428 = vsel %vm420, %v407, %v410
    %v429 = vsel %vm423, %v416, 920167782
    %v430 = vsel %vm422, %v413, %v429
    %v431 = vsel %vm421, %v428, %v430
    %v432 = vsel %vm420, %v410, %v413
    %v433 = vsel %vm423, %v419, 1326507024
    %v434 = vsel %vm422, %v416, %v433
    %v435 = vsel %vm421, %v432, %v434
    %v436 = vshll.u32 %v396, 8
    %v437 = vmul.u32.u64.compose %v436, %v435
    %v438 = vextract.low.u32 %v437
    %v439 = vextract.high.u32 %v437
    %v440 = vmul.u32.u64.compose %v436, %v431
    %v441 = vextract.low.u32 %v440
    %v442 = vextract.high.u32 %v440
    %v443 = vmul.u32 %v436, %v427
    %v444 = vadd.s32 %v439, %v441
    %vm445 = vc.u32 %v439, %v441
    %v446 = vadd.s32 %v442, 1
    %v447 = vsel %vm445, %v446, %v442
    %v448 = vadd.s32 %v443, %v447
    %v449 = vadd.s32 %v448, 536870912
    %v450 = vshrl.u32 %v449, 30
    %v451 = vshll.u32 %v450, 30
    %v452 = vsub.s32 %v448, %v451
    %vm453 = vcmp.lt.s32.totalorder %v452, 0
    %v454 = vsub.s32 0, %v452
    %v455 = vsel %vm453, %v454, %v452
    %v456 = vclz %v455
    %v457 = vsub.s32 %v456, 2
    %vm458 = vcmp.gt.s32.totalorder 0, %v457
    %v459 = vsel %vm458, 0, %v457
    %v460 = vsub.s32 32, %v459
    %v461 = vshll.u32 %v452, %v459
    %v462 = vshrl.u32 %v444, %v460
    %v463 = vor.u32 %v461, %v462
    %v464 = vsub.s32 4294967266, %v459
    %v465 = vadd.s32 %v464, 127
    %v466 = vshll.u32 %v465, 23
    %v467 = vor.u32 4788187, %v466
    %v468 = vand.u32 2147483647, %v467
    %v470 = vcvt.s32.f32 %v463
    %v471 = vmul.f32 %v470, %v468
    %v472 = vxor.u32 %v471, 2147483648
    %v473 = vsel %vm390, %v472, %v471
    %v474 = vsub.s32 4, %v450
    %v475 = vsel %vm390, %v474, %v450
    %v476 = vsel %vm389, %v75, %v473
    %v477 = vsel %vm389, 0, %v475
    %v478 = vcosq.f32.pop %v476
    %v479 = vsinq.f32.pop %v476
    %vm480 = vweird.f32 %v75
    %v481 = vand.u32 %v477, 3
    %vm482 = vcmp.lt.s32.totalorder %v481, 2
    %vm483 = vcmp.eq.s32.totalorder %v481, 0
    %v484 = vxor.u32 %v479, 2147483648
    %v485 = vsel %vm483, %v478, %v484
    %vm486 = vcmp.eq.s32.totalorder %v481, 2
    %v487 = vxor.u32 %v478, 2147483648
    %v488 = vsel %vm486, %v487, %v479
    %v489 = vsel %vm482, %v485, %v488
    %v490 = vsel %vm480, nan, %v489
    %v491 = vsel %vm76, %v180, %v387
    %v492 = vsel %vm76, %v284, %v490
    %vm493 = vcmask 261120
    %v495 = vsel %vm493, %v51, 0
    %v498 = vsel %vm493, %v52, 0
    %500 = vmatprep.subr.mxu0 0.0
    %501 = vmatpush1.msra.mxu0 0.0
    %502 = vmatprep.subr.mxu0 0.0
    %503 = vmatpush1.msra.mxu0 0.0
    %504 = vmatprep.subr.mxu0 0.0
    %505 = vmatpush1.msra.mxu0 0.0
    %506 = vmatprep.subr.mxu0 0.0
    %507 = vmatpush1.msra.mxu0 0.0
    %508 = vmatprep.subr.mxu0 0.0
    %509 = vmatpush1.msra.mxu0 0.0
    %510 = vmatprep.subr.mxu0 0.0
    %511 = vmatpush1.msra.mxu0 0.0
    %512 = vmatprep.subr.mxu0 0.0
    %513 = vmatpush1.msra.mxu0 0.0
    %514 = vmatprep.subr.mxu0 0.0
    %515 = vmatpush1.msra.mxu0 0.0
    %516 = vmatprep.subr.mxu0 0.0
    %517 = vmatpush1.msra.mxu0 0.0
    %518 = vmatprep.subr.mxu0 0.0
    %519 = vmatpush1.msra.mxu0 0.0
    %520 = vmatprep.subr.mxu0 0.0
    %521 = vmatpush1.msra.mxu0 0.0
    %522 = vmatprep.subr.mxu0 0.0
    %523 = vmatpush1.msra.mxu0 0.0
    %524 = vmatprep.subr.mxu0 0.0
    %525 = vmatpush1.msra.mxu0 %v56
    %526 = vmatprep.subr.mxu0 0.0
    %527 = vmatpush1.msra.mxu0 %v55
    %528 = vmatprep.subr.mxu0 0.0
    %529 = vmatpush1.msra.mxu0 %v54
    %530 = vmatprep.subr.mxu0 0.0
    %531 = vmatpush1.msra.mxu0 %v53
    %532 = vmatprep.subr.mxu0 0.0
    %533 = vmatpush2.msra.mxu0 0.0
    %534 = vmatprep.subr.mxu0 0.0
    %535 = vmatpush2.msra.mxu0 0.0
    %536 = vmatprep.subr.mxu0 0.0
    %537 = vmatpush2.msra.mxu0 0.0
    %538 = vmatprep.subr.mxu0 0.0
    %539 = vmatpush2.msra.mxu0 0.0
    %540 = vmatprep.subr.mxu0 0.0
    %541 = vmatpush2.msra.mxu0 0.0
    %542 = vmatprep.subr.mxu0 0.0
    %543 = vmatpush2.msra.mxu0 0.0
    %544 = vmatprep.subr.mxu0 0.0
    %545 = vmatpush2.msra.mxu0 0.0
    %546 = vmatprep.subr.mxu0 0.0
    %547 = vmatpush2.msra.mxu0 0.0
    %548 = vmatprep.subr.mxu0 0.0
    %549 = vmatpush2.msra.mxu0 0.0
    %550 = vmatprep.subr.mxu0 0.0
    %551 = vmatpush2.msra.mxu0 0.0
    %552 = vmatprep.subr.mxu0 0.0
    %553 = vmatpush2.msra.mxu0 0.0
    %554 = vmatprep.subr.mxu0 0.0
    %555 = vmatpush2.msra.mxu0 0.0
    %556 = vmatprep.subr.mxu0 0.0
    %557 = vmatpush2.msra.mxu0 0.0
    %558 = vmatprep.subr.mxu0 0.0
    %559 = vmatpush2.msra.mxu0 0.0
    %560 = vmatprep.subr.mxu0 0.0
    %561 = vmatpush2.msra.mxu0 0.0
    %562 = vmatprep.subr.mxu0 0.0
    %563 = vmatpush2.msra.mxu0 0.0
    %564 = vmatprep.mubr.f32.mxu0 0.0
    %565 = vmatmul.mubr.f32.gmra.mxu0 %v495
    %v566 = vpop.f32.mrf.mxu0
    %v567 = vadd.f32 %v491, %v566
    %v568 = vpop.f32.mrf.mxu0
    %569 = vmatprep.mubr.f32.mxu0 0.0
    %570 = vmatmul.mubr.f32.gmra.mxu0 %v498
    %v571 = vpop.f32.mrf.mxu0
    %v572 = vadd.f32 %v492, %v571
    %v573 = vpop.f32.mrf.mxu0
    %574 = vdwg.mxu0
    %v575 = vld [vmem:[%s3 + $0x10] sm:$0xff]
    %v576 = vld [vmem:[%s3 + $0x18] sm:$0xff]
    %v577 = vadd.f32 %v567, %v575
    %v578 = vadd.f32 %v572, %v576
    %v579 = vld [vmem:[%s3 + $0x1] sm:$0x1]
    %v580 = vld [vmem:[%s3 + $0x2] sm:$0x1]
    %v581 = vsel %vm493, %v577, 0.0
    %582 = vadd.xlane.f32.xlu0 %v581
    %v583 = vpop.xlane.xlu0 %582
    %v584 = vsel %vm493, %v578, 0.0
    %585 = vadd.xlane.f32.xlu0 %v584
    %v586 = vpop.xlane.xlu0 %585
    %v587 = vrcp.pop 32.0
    %v588 = vmul.f32 %v583, %v587
    %v589 = vmul.f32 %v586, %v587
    %v590 = vsub.f32 %v577, %v588
    %v591 = vsub.f32 %v578, %v589
    %v592 = vmul.f32 %v590, %v590
    %v593 = vmul.f32 %v591, %v591
    %v594 = vsel %vm493, %v592, 0.0
    %595 = vadd.xlane.f32.xlu0 %v594
    %v596 = vpop.xlane.xlu0 %595
    %v597 = vsel %vm493, %v593, 0.0
    %598 = vadd.xlane.f32.xlu0 %v597
    %v599 = vpop.xlane.xlu0 %598
    %v600 = vmul.f32 %v596, %v587
    %v601 = vmul.f32 %v599, %v587
    %v602 = vadd.f32 %v600, 1e-12
    %v603 = vadd.f32 %v601, 1e-12
    %v604 = vrsqrt.pop %v602
    %v605 = vrsqrt.pop %v603
    %v606 = vmul.f32 %v590, %v604
    %v607 = vmul.f32 %v591, %v605
    %v608 = vlaneseq
    %v609 = vshrl.u32 %v608, 7
    %v610 = vsub.s32 0, %v609
    %v611 = vrot.slane %v579, %v610
    %v612 = vmul.f32 %v606, %v611
    %v613 = vmul.f32 %v607, %v611
    %v614 = vlaneseq
    %v615 = vshrl.u32 %v614, 7
    %v616 = vsub.s32 0, %v615
    %v617 = vrot.slane %v580, %v616
    %v618 = vadd.f32 %v612, %v617
    %v619 = vadd.f32 %v613, %v617
    %v620 = vld [vmem:[#allocation2 + $0x20] sm:$0xff]
    %v621 = vld [vmem:[#allocation2 + $0x28] sm:$0xff]
    %v622 = vld [vmem:[#allocation2 + $0x30] sm:$0xff]
    %v623 = vld [vmem:[#allocation2 + $0x38] sm:$0xff]
    %v624 = vld [vmem:[%s3 + $0x3] sm:$0x1]
    %v625 = vlaneseq
    %v626 = vshrl.u32 %v625, 7
    %v627 = vsub.s32 0, %v626
    %v628 = vrot.slane %v624, %v627
    %v630 = vsel %vm493, %v618, 0
    %v633 = vsel %vm493, %v619, 0
    %635 = vmatprep.subr.mxu0 0.0
    %636 = vmatpush1.msra.mxu0 0.0
    %637 = vmatprep.subr.mxu0 0.0
    %638 = vmatpush1.msra.mxu0 0.0
    %639 = vmatprep.subr.mxu0 0.0
    %640 = vmatpush1.msra.mxu0 0.0
    %641 = vmatprep.subr.mxu0 0.0
    %642 = vmatpush1.msra.mxu0 0.0
    %643 = vmatprep.subr.mxu0 0.0
    %644 = vmatpush1.msra.mxu0 0.0
    %645 = vmatprep.subr.mxu0 0.0
    %646 = vmatpush1.msra.mxu0 0.0
    %647 = vmatprep.subr.mxu0 0.0
    %648 = vmatpush1.msra.mxu0 0.0
    %649 = vmatprep.subr.mxu0 0.0
    %650 = vmatpush1.msra.mxu0 0.0
    %651 = vmatprep.subr.mxu0 0.0
    %652 = vmatpush1.msra.mxu0 0.0
    %653 = vmatprep.subr.mxu0 0.0
    %654 = vmatpush1.msra.mxu0 0.0
    %655 = vmatprep.subr.mxu0 0.0
    %656 = vmatpush1.msra.mxu0 0.0
    %657 = vmatprep.subr.mxu0 0.0
    %658 = vmatpush1.msra.mxu0 0.0
    %659 = vmatprep.subr.mxu0 0.0
    %660 = vmatpush1.msra.mxu0 %v623
    %661 = vmatprep.subr.mxu0 0.0
    %662 = vmatpush1.msra.mxu0 %v622
    %663 = vmatprep.subr.mxu0 0.0
    %664 = vmatpush1.msra.mxu0 %v621
    %665 = vmatprep.subr.mxu0 0.0
    %666 = vmatpush1.msra.mxu0 %v620
    %667 = vmatprep.subr.mxu0 0.0
    %668 = vmatpush2.msra.mxu0 0.0
    %669 = vmatprep.subr.mxu0 0.0
    %670 = vmatpush2.msra.mxu0 0.0
    %671 = vmatprep.subr.mxu0 0.0
    %672 = vmatpush2.msra.mxu0 0.0
    %673 = vmatprep.subr.mxu0 0.0
    %674 = vmatpush2.msra.mxu0 0.0
    %675 = vmatprep.subr.mxu0 0.0
    %676 = vmatpush2.msra.mxu0 0.0
    %677 = vmatprep.subr.mxu0 0.0
    %678 = vmatpush2.msra.mxu0 0.0
    %679 = vmatprep.subr.mxu0 0.0
    %680 = vmatpush2.msra.mxu0 0.0
    %681 = vmatprep.subr.mxu0 0.0
    %682 = vmatpush2.msra.mxu0 0.0
    %683 = vmatprep.subr.mxu0 0.0
    %684 = vmatpush2.msra.mxu0 0.0
    %685 = vmatprep.subr.mxu0 0.0
    %686 = vmatpush2.msra.mxu0 0.0
    %687 = vmatprep.subr.mxu0 0.0
    %688 = vmatpush2.msra.mxu0 0.0
    %689 = vmatprep.subr.mxu0 0.0
    %690 = vmatpush2.msra.mxu0 0.0
    %691 = vmatprep.subr.mxu0 0.0
    %692 = vmatpush2.msra.mxu0 0.0
    %693 = vmatprep.subr.mxu0 0.0
    %694 = vmatpush2.msra.mxu0 0.0
    %695 = vmatprep.subr.mxu0 0.0
    %696 = vmatpush2.msra.mxu0 0.0
    %697 = vmatprep.subr.mxu0 0.0
    %698 = vmatpush2.msra.mxu0 0.0
    %699 = vmatprep.mubr.f32.mxu0 0.0
    %700 = vmatmul.mubr.f32.gmra.mxu0 %v630
    %v701 = vpop.f32.mrf.mxu0
    %v702 = vadd.f32 %v628, %v701
    %v703 = vpop.f32.mrf.mxu0
    %704 = vmatprep.mubr.f32.mxu0 0.0
    %705 = vmatmul.mubr.f32.gmra.mxu0 %v633
    %v706 = vpop.f32.mrf.mxu0
    %v707 = vadd.f32 %v628, %v706
    %v708 = vpop.f32.mrf.mxu0
    %709 = vdwg.mxu0
    %v710 = vld [vmem:[%s1] sm:$0x1]
    %v711 = vsub.f32 1.0, %v710
    %v712 = vmul.f32 %v711, -3.4028235e+38
    %v714 = vlaneseq
    %v715 = vshrl.u32 %v714, 7
    %v716 = vsub.s32 0, %v715
    %v717 = vrot.slane %v712, %v716
    %v719 = vld [vmem:[%s3 + $0x20] sm:$0xff]
    %v720 = vld [vmem:[%s3 + $0x28] sm:$0xff]
    %vm721 = vcmp.gt.f32.partialorder %v719, 0.5
    %vm722 = vcmp.gt.f32.partialorder %v720, 0.5
    %v723 = vsel %vm721, %v717, -3.4028235e+38
    %v724 = vsel %vm722, %v717, -3.4028235e+38
    %727 = vrot.lane.b32.xlu0 %v702, 96
    %v728 = vpop.permute.xlu0 %727
    %729 = vrot.lane.b32.xlu0 %v707, 96
    %v730 = vpop.permute.xlu0 %729
    %vm731 = vcmask 130048
    %v732 = vsel %vm731, %v702, 0
    %v734 = vsel %vm731, %v707, 0
    %v736 = vsel %vm731, %v728, 0
    %v738 = vsel %vm731, %v730, 0
    %740 = vmatprep.subr.mxu0 0.0
    %741 = vmatpush1.xpose.msra.mxu0 0.0
    %742 = vmatprep.subr.mxu0 0.0
    %743 = vmatpush1.xpose.msra.mxu0 0.0
    %744 = vmatprep.subr.mxu0 0.0
    %745 = vmatpush1.xpose.msra.mxu0 0.0
    %746 = vmatprep.subr.mxu0 0.0
    %747 = vmatpush1.xpose.msra.mxu0 0.0
    %748 = vmatprep.subr.mxu0 0.0
    %749 = vmatpush1.xpose.msra.mxu0 0.0
    %750 = vmatprep.subr.mxu0 0.0
    %751 = vmatpush1.xpose.msra.mxu0 0.0
    %752 = vmatprep.subr.mxu0 0.0
    %753 = vmatpush1.xpose.msra.mxu0 0.0
    %754 = vmatprep.subr.mxu0 0.0
    %755 = vmatpush1.xpose.msra.mxu0 0.0
    %756 = vmatprep.subr.mxu0 0.0
    %757 = vmatpush1.xpose.msra.mxu0 0.0
    %758 = vmatprep.subr.mxu0 0.0
    %759 = vmatpush1.xpose.msra.mxu0 0.0
    %760 = vmatprep.subr.mxu0 0.0
    %761 = vmatpush1.xpose.msra.mxu0 0.0
    %762 = vmatprep.subr.mxu0 0.0
    %763 = vmatpush1.xpose.msra.mxu0 0.0
    %764 = vmatprep.subr.mxu0 0.0
    %765 = vmatpush1.xpose.msra.mxu0 0.0
    %766 = vmatprep.subr.mxu0 0.0
    %767 = vmatpush1.xpose.msra.mxu0 0.0
    %768 = vmatprep.subr.mxu0 0.0
    %769 = vmatpush1.xpose.msra.mxu0 %v738
    %770 = vmatprep.subr.mxu0 0.0
    %771 = vmatpush1.xpose.msra.mxu0 %v736
    %772 = vmatprep.subr.mxu0 0.0
    %773 = vmatpush2.xpose.msra.mxu0 0.0
    %774 = vmatprep.subr.mxu0 0.0
    %775 = vmatpush2.xpose.msra.mxu0 0.0
    %776 = vmatprep.subr.mxu0 0.0
    %777 = vmatpush2.xpose.msra.mxu0 0.0
    %778 = vmatprep.subr.mxu0 0.0
    %779 = vmatpush2.xpose.msra.mxu0 0.0
    %780 = vmatprep.subr.mxu0 0.0
    %781 = vmatpush2.xpose.msra.mxu0 0.0
    %782 = vmatprep.subr.mxu0 0.0
    %783 = vmatpush2.xpose.msra.mxu0 0.0
    %784 = vmatprep.subr.mxu0 0.0
    %785 = vmatpush2.xpose.msra.mxu0 0.0
    %786 = vmatprep.subr.mxu0 0.0
    %787 = vmatpush2.xpose.msra.mxu0 0.0
    %788 = vmatprep.subr.mxu0 0.0
    %789 = vmatpush2.xpose.msra.mxu0 0.0
    %790 = vmatprep.subr.mxu0 0.0
    %791 = vmatpush2.xpose.msra.mxu0 0.0
    %792 = vmatprep.subr.mxu0 0.0
    %793 = vmatpush2.xpose.msra.mxu0 0.0
    %794 = vmatprep.subr.mxu0 0.0
    %795 = vmatpush2.xpose.msra.mxu0 0.0
    %796 = vmatprep.subr.mxu0 0.0
    %797 = vmatpush2.xpose.msra.mxu0 0.0
    %798 = vmatprep.subr.mxu0 0.0
    %799 = vmatpush2.xpose.msra.mxu0 0.0
    %800 = vmatprep.subr.mxu0 0.0
    %801 = vmatpush2.xpose.msra.mxu0 0.0
    %802 = vmatprep.subr.mxu0 0.0
    %803 = vmatpush2.xpose.msra.mxu0 0.0
    %804 = vmatprep.mubr.f32.mxu0 0.0
    %805 = vmatmul.mubr.f32.gmra.mxu0 %v732
    %v806 = vpop.f32.mrf.mxu0
    %v807 = vadd.f32 0.0, %v806
    %v808 = vpop.f32.mrf.mxu0
    %809 = vmatprep.mubr.f32.mxu0 0.0
    %810 = vmatmul.mubr.f32.gmra.mxu0 %v734
    %v811 = vpop.f32.mrf.mxu0
    %v812 = vadd.f32 0.0, %v811
    %v813 = vpop.f32.mrf.mxu0
    %814 = vdwg.mxu0
    %v815 = vmul.f32 %v807, 0.25
    %v816 = vmul.f32 %v812, 0.25
    %v817 = vadd.f32 %v815, %v723
    %v818 = vadd.f32 %v816, %v724
    %v819 = vsel %vm731, %v817, -inf
    %820 = vmax.xlane.f32.xlu0 %v819
    %v821 = vpop.xlane.xlu0 %820
    %v822 = vsel %vm731, %v818, -inf
    %823 = vmax.xlane.f32.xlu0 %v822
    %v824 = vpop.xlane.xlu0 %823
    %v825 = vsub.f32 %v817, %v821
    %v826 = vsub.f32 %v818, %v824
    %v827 = vmul.f32 %v825, 1.442695
    %v828 = vpow.pop %v827
    %v829 = vmul.f32 %v826, 1.442695
    %v830 = vpow.pop %v829
    %v831 = vsel %vm731, %v828, 0.0
    %832 = vadd.xlane.f32.xlu0 %v831
    %v833 = vpop.xlane.xlu0 %832
    %v834 = vsel %vm731, %v830, 0.0
    %835 = vadd.xlane.f32.xlu0 %v834
    %v836 = vpop.xlane.xlu0 %835
    %v837 = vrcp.pop %v833
    %v838 = vrcp.pop %v836
    %v839 = vmul.f32 %v828, %v837
    %v840 = vmul.f32 %v830, %v838
    %841 = vrot.lane.b32.xlu0 %v702, 64
    %v842 = vpop.permute.xlu0 %841
    %843 = vrot.lane.b32.xlu0 %v707, 64
    %v844 = vpop.permute.xlu0 %843
    %v848 = vsel %vm731, %v839, 0
    %v851 = vsel %vm731, %v840, 0
    %853 = vmatprep.subr.mxu0 0.0
    %854 = vmatpush1.msra.mxu0 0.0
    %855 = vmatprep.subr.mxu0 0.0
    %856 = vmatpush1.msra.mxu0 0.0
    %857 = vmatprep.subr.mxu0 0.0
    %858 = vmatpush1.msra.mxu0 0.0
    %859 = vmatprep.subr.mxu0 0.0
    %860 = vmatpush1.msra.mxu0 0.0
    %861 = vmatprep.subr.mxu0 0.0
    %862 = vmatpush1.msra.mxu0 0.0
    %863 = vmatprep.subr.mxu0 0.0
    %864 = vmatpush1.msra.mxu0 0.0
    %865 = vmatprep.subr.mxu0 0.0
    %866 = vmatpush1.msra.mxu0 0.0
    %867 = vmatprep.subr.mxu0 0.0
    %868 = vmatpush1.msra.mxu0 0.0
    %869 = vmatprep.subr.mxu0 0.0
    %870 = vmatpush1.msra.mxu0 0.0
    %871 = vmatprep.subr.mxu0 0.0
    %872 = vmatpush1.msra.mxu0 0.0
    %873 = vmatprep.subr.mxu0 0.0
    %874 = vmatpush1.msra.mxu0 0.0
    %875 = vmatprep.subr.mxu0 0.0
    %876 = vmatpush1.msra.mxu0 0.0
    %877 = vmatprep.subr.mxu0 0.0
    %878 = vmatpush1.msra.mxu0 0.0
    %879 = vmatprep.subr.mxu0 0.0
    %880 = vmatpush1.msra.mxu0 0.0
    %881 = vmatprep.subr.mxu0 0.0
    %882 = vmatpush1.msra.mxu0 %v844
    %883 = vmatprep.subr.mxu0 0.0
    %884 = vmatpush1.msra.mxu0 %v842
    %885 = vmatprep.subr.mxu0 0.0
    %886 = vmatpush2.msra.mxu0 0.0
    %887 = vmatprep.subr.mxu0 0.0
    %888 = vmatpush2.msra.mxu0 0.0
    %889 = vmatprep.subr.mxu0 0.0
    %890 = vmatpush2.msra.mxu0 0.0
    %891 = vmatprep.subr.mxu0 0.0
    %892 = vmatpush2.msra.mxu0 0.0
    %893 = vmatprep.subr.mxu0 0.0
    %894 = vmatpush2.msra.mxu0 0.0
    %895 = vmatprep.subr.mxu0 0.0
    %896 = vmatpush2.msra.mxu0 0.0
    %897 = vmatprep.subr.mxu0 0.0
    %898 = vmatpush2.msra.mxu0 0.0
    %899 = vmatprep.subr.mxu0 0.0
    %900 = vmatpush2.msra.mxu0 0.0
    %901 = vmatprep.subr.mxu0 0.0
    %902 = vmatpush2.msra.mxu0 0.0
    %903 = vmatprep.subr.mxu0 0.0
    %904 = vmatpush2.msra.mxu0 0.0
    %905 = vmatprep.subr.mxu0 0.0
    %906 = vmatpush2.msra.mxu0 0.0
    %907 = vmatprep.subr.mxu0 0.0
    %908 = vmatpush2.msra.mxu0 0.0
    %909 = vmatprep.subr.mxu0 0.0
    %910 = vmatpush2.msra.mxu0 0.0
    %911 = vmatprep.subr.mxu0 0.0
    %912 = vmatpush2.msra.mxu0 0.0
    %913 = vmatprep.subr.mxu0 0.0
    %914 = vmatpush2.msra.mxu0 0.0
    %915 = vmatprep.subr.mxu0 0.0
    %916 = vmatpush2.msra.mxu0 0.0
    %917 = vmatprep.mubr.f32.mxu0 0.0
    %918 = vmatmul.mubr.f32.gmra.mxu0 %v848
    %v919 = vpop.f32.mrf.mxu0
    %v920 = vadd.f32 0.0, %v919
    %v921 = vpop.f32.mrf.mxu0
    %922 = vmatprep.mubr.f32.mxu0 0.0
    %923 = vmatmul.mubr.f32.gmra.mxu0 %v851
    %v924 = vpop.f32.mrf.mxu0
    %v925 = vadd.f32 0.0, %v924
    %v926 = vpop.f32.mrf.mxu0
    %927 = vdwg.mxu0
    %928 = vrot.lane.b32.xlu0 %v702, 112
    %v929 = vpop.permute.xlu0 %928
    %930 = vrot.lane.b32.xlu0 %v707, 112
    %v931 = vpop.permute.xlu0 %930
    %932 = vrot.lane.b32.xlu0 %v702, 80
    %v933 = vpop.permute.xlu0 %932
    %934 = vrot.lane.b32.xlu0 %v707, 80
    %v935 = vpop.permute.xlu0 %934
    %v936 = vsel %vm731, %v929, 0
    %v938 = vsel %vm731, %v931, 0
    %v940 = vsel %vm731, %v933, 0
    %v942 = vsel %vm731, %v935, 0
    %944 = vmatprep.subr.mxu0 0.0
    %945 = vmatpush1.xpose.msra.mxu0 0.0
    %946 = vmatprep.subr.mxu0 0.0
    %947 = vmatpush1.xpose.msra.mxu0 0.0
    %948 = vmatprep.subr.mxu0 0.0
    %949 = vmatpush1.xpose.msra.mxu0 0.0
    %950 = vmatprep.subr.mxu0 0.0
    %951 = vmatpush1.xpose.msra.mxu0 0.0
    %952 = vmatprep.subr.mxu0 0.0
    %953 = vmatpush1.xpose.msra.mxu0 0.0
    %954 = vmatprep.subr.mxu0 0.0
    %955 = vmatpush1.xpose.msra.mxu0 0.0
    %956 = vmatprep.subr.mxu0 0.0
    %957 = vmatpush1.xpose.msra.mxu0 0.0
    %958 = vmatprep.subr.mxu0 0.0
    %959 = vmatpush1.xpose.msra.mxu0 0.0
    %960 = vmatprep.subr.mxu0 0.0
    %961 = vmatpush1.xpose.msra.mxu0 0.0
    %962 = vmatprep.subr.mxu0 0.0
    %963 = vmatpush1.xpose.msra.mxu0 0.0
    %964 = vmatprep.subr.mxu0 0.0
    %965 = vmatpush1.xpose.msra.mxu0 0.0
    %966 = vmatprep.subr.mxu0 0.0
    %967 = vmatpush1.xpose.msra.mxu0 0.0
    %968 = vmatprep.subr.mxu0 0.0
    %969 = vmatpush1.xpose.msra.mxu0 0.0
    %970 = vmatprep.subr.mxu0 0.0
    %971 = vmatpush1.xpose.msra.mxu0 0.0
    %972 = vmatprep.subr.mxu0 0.0
    %973 = vmatpush1.xpose.msra.mxu0 %v942
    %974 = vmatprep.subr.mxu0 0.0
    %975 = vmatpush1.xpose.msra.mxu0 %v940
    %976 = vmatprep.subr.mxu0 0.0
    %977 = vmatpush2.xpose.msra.mxu0 0.0
    %978 = vmatprep.subr.mxu0 0.0
    %979 = vmatpush2.xpose.msra.mxu0 0.0
    %980 = vmatprep.subr.mxu0 0.0
    %981 = vmatpush2.xpose.msra.mxu0 0.0
    %982 = vmatprep.subr.mxu0 0.0
    %983 = vmatpush2.xpose.msra.mxu0 0.0
    %984 = vmatprep.subr.mxu0 0.0
    %985 = vmatpush2.xpose.msra.mxu0 0.0
    %986 = vmatprep.subr.mxu0 0.0
    %987 = vmatpush2.xpose.msra.mxu0 0.0
    %988 = vmatprep.subr.mxu0 0.0
    %989 = vmatpush2.xpose.msra.mxu0 0.0
    %990 = vmatprep.subr.mxu0 0.0
    %991 = vmatpush2.xpose.msra.mxu0 0.0
    %992 = vmatprep.subr.mxu0 0.0
    %993 = vmatpush2.xpose.msra.mxu0 0.0
    %994 = vmatprep.subr.mxu0 0.0
    %995 = vmatpush2.xpose.msra.mxu0 0.0
    %996 = vmatprep.subr.mxu0 0.0
    %997 = vmatpush2.xpose.msra.mxu0 0.0
    %998 = vmatprep.subr.mxu0 0.0
    %999 = vmatpush2.xpose.msra.mxu0 0.0
    %1000 = vmatprep.subr.mxu0 0.0
    %1001 = vmatpush2.xpose.msra.mxu0 0.0
    %1002 = vmatprep.subr.mxu0 0.0
    %1003 = vmatpush2.xpose.msra.mxu0 0.0
    %1004 = vmatprep.subr.mxu0 0.0
    %1005 = vmatpush2.xpose.msra.mxu0 0.0
    %1006 = vmatprep.subr.mxu0 0.0
    %1007 = vmatpush2.xpose.msra.mxu0 0.0
    %1008 = vmatprep.mubr.f32.mxu0 0.0
    %1009 = vmatmul.mubr.f32.gmra.mxu0 %v936
    %v1010 = vpop.f32.mrf.mxu0
    %v1011 = vadd.f32 0.0, %v1010
    %v1012 = vpop.f32.mrf.mxu0
    %1013 = vmatprep.mubr.f32.mxu0 0.0
    %1014 = vmatmul.mubr.f32.gmra.mxu0 %v938
    %v1015 = vpop.f32.mrf.mxu0
    %v1016 = vadd.f32 0.0, %v1015
    %v1017 = vpop.f32.mrf.mxu0
    %1018 = vdwg.mxu0
    %v1019 = vmul.f32 %v1011, 0.25
    %v1020 = vmul.f32 %v1016, 0.25
    %v1021 = vadd.f32 %v1019, %v723
    %v1022 = vadd.f32 %v1020, %v724
    %v1023 = vsel %vm731, %v1021, -inf
    %1024 = vmax.xlane.f32.xlu0 %v1023
    %v1025 = vpop.xlane.xlu0 %1024
    %v1026 = vsel %vm731, %v1022, -inf
    %1027 = vmax.xlane.f32.xlu0 %v1026
    %v1028 = vpop.xlane.xlu0 %1027
    %v1029 = vsub.f32 %v1021, %v1025
    %v1030 = vsub.f32 %v1022, %v1028
    %v1031 = vmul.f32 %v1029, 1.442695
    %v1032 = vpow.pop %v1031
    %v1033 = vmul.f32 %v1030, 1.442695
    %v1034 = vpow.pop %v1033
    %v1035 = vsel %vm731, %v1032, 0.0
    %1036 = vadd.xlane.f32.xlu0 %v1035
    %v1037 = vpop.xlane.xlu0 %1036
    %v1038 = vsel %vm731, %v1034, 0.0
    %1039 = vadd.xlane.f32.xlu0 %v1038
    %v1040 = vpop.xlane.xlu0 %1039
    %v1041 = vrcp.pop %v1037
    %v1042 = vrcp.pop %v1040
    %v1043 = vmul.f32 %v1032, %v1041
    %v1044 = vmul.f32 %v1034, %v1042
    %1045 = vrot.lane.b32.xlu0 %v702, 48
    %v1046 = vpop.permute.xlu0 %1045
    %1047 = vrot.lane.b32.xlu0 %v707, 48
    %v1048 = vpop.permute.xlu0 %1047
    %v1052 = vsel %vm731, %v1043, 0
    %v1055 = vsel %vm731, %v1044, 0
    %1057 = vmatprep.subr.mxu0 0.0
    %1058 = vmatpush1.msra.mxu0 0.0
    %1059 = vmatprep.subr.mxu0 0.0
    %1060 = vmatpush1.msra.mxu0 0.0
    %1061 = vmatprep.subr.mxu0 0.0
    %1062 = vmatpush1.msra.mxu0 0.0
    %1063 = vmatprep.subr.mxu0 0.0
    %1064 = vmatpush1.msra.mxu0 0.0
    %1065 = vmatprep.subr.mxu0 0.0
    %1066 = vmatpush1.msra.mxu0 0.0
    %1067 = vmatprep.subr.mxu0 0.0
    %1068 = vmatpush1.msra.mxu0 0.0
    %1069 = vmatprep.subr.mxu0 0.0
    %1070 = vmatpush1.msra.mxu0 0.0
    %1071 = vmatprep.subr.mxu0 0.0
    %1072 = vmatpush1.msra.mxu0 0.0
    %1073 = vmatprep.subr.mxu0 0.0
    %1074 = vmatpush1.msra.mxu0 0.0
    %1075 = vmatprep.subr.mxu0 0.0
    %1076 = vmatpush1.msra.mxu0 0.0
    %1077 = vmatprep.subr.mxu0 0.0
    %1078 = vmatpush1.msra.mxu0 0.0
    %1079 = vmatprep.subr.mxu0 0.0
    %1080 = vmatpush1.msra.mxu0 0.0
    %1081 = vmatprep.subr.mxu0 0.0
    %1082 = vmatpush1.msra.mxu0 0.0
    %1083 = vmatprep.subr.mxu0 0.0
    %1084 = vmatpush1.msra.mxu0 0.0
    %1085 = vmatprep.subr.mxu0 0.0
    %1086 = vmatpush1.msra.mxu0 %v1048
    %1087 = vmatprep.subr.mxu0 0.0
    %1088 = vmatpush1.msra.mxu0 %v1046
    %1089 = vmatprep.subr.mxu0 0.0
    %1090 = vmatpush2.msra.mxu0 0.0
    %1091 = vmatprep.subr.mxu0 0.0
    %1092 = vmatpush2.msra.mxu0 0.0
    %1093 = vmatprep.subr.mxu0 0.0
    %1094 = vmatpush2.msra.mxu0 0.0
    %1095 = vmatprep.subr.mxu0 0.0
    %1096 = vmatpush2.msra.mxu0 0.0
    %1097 = vmatprep.subr.mxu0 0.0
    %1098 = vmatpush2.msra.mxu0 0.0
    %1099 = vmatprep.subr.mxu0 0.0
    %1100 = vmatpush2.msra.mxu0 0.0
    %1101 = vmatprep.subr.mxu0 0.0
    %1102 = vmatpush2.msra.mxu0 0.0
    %1103 = vmatprep.subr.mxu0 0.0
    %1104 = vmatpush2.msra.mxu0 0.0
    %1105 = vmatprep.subr.mxu0 0.0
    %1106 = vmatpush2.msra.mxu0 0.0
    %1107 = vmatprep.subr.mxu0 0.0
    %1108 = vmatpush2.msra.mxu0 0.0
    %1109 = vmatprep.subr.mxu0 0.0
    %1110 = vmatpush2.msra.mxu0 0.0
    %1111 = vmatprep.subr.mxu0 0.0
    %1112 = vmatpush2.msra.mxu0 0.0
    %1113 = vmatprep.subr.mxu0 0.0
    %1114 = vmatpush2.msra.mxu0 0.0
    %1115 = vmatprep.subr.mxu0 0.0
    %1116 = vmatpush2.msra.mxu0 0.0
    %1117 = vmatprep.subr.mxu0 0.0
    %1118 = vmatpush2.msra.mxu0 0.0
    %1119 = vmatprep.subr.mxu0 0.0
    %1120 = vmatpush2.msra.mxu0 0.0
    %1121 = vmatprep.mubr.f32.mxu0 0.0
    %1122 = vmatmul.mubr.f32.gmra.mxu0 %v1052
    %v1123 = vpop.f32.mrf.mxu0
    %v1124 = vadd.f32 0.0, %v1123
    %v1125 = vpop.f32.mrf.mxu0
    %1126 = vmatprep.mubr.f32.mxu0 0.0
    %1127 = vmatmul.mubr.f32.gmra.mxu0 %v1055
    %v1128 = vpop.f32.mrf.mxu0
    %v1129 = vadd.f32 0.0, %v1128
    %v1130 = vpop.f32.mrf.mxu0
    %1131 = vdwg.mxu0
    %1134 = vrot.lane.b32.xlu0 %v1124, 16
    %v1135 = vpop.permute.xlu0 %1134
    %1136 = vrot.lane.b32.xlu0 %v1129, 16
    %v1137 = vpop.permute.xlu0 %1136
    %v1140 = vsel %vm731, %v920, %v1135
    %v1141 = vsel %vm731, %v925, %v1137
    %v1142 = vld [vmem:[#allocation2 + $0x40] sm:$0xff]
    %v1143 = vld [vmem:[#allocation2 + $0x48] sm:$0xff]
    %v1144 = vld [vmem:[#allocation2 + $0x50] sm:$0xff]
    %v1145 = vld [vmem:[#allocation2 + $0x58] sm:$0xff]
    %v1146 = vld [vmem:[%s3 + $0x4] sm:$0x1]
    %v1147 = vlaneseq
    %v1148 = vshrl.u32 %v1147, 7
    %v1149 = vsub.s32 0, %v1148
    %v1150 = vrot.slane %v1146, %v1149
    %v1152 = vsel %vm493, %v1140, 0
    %v1155 = vsel %vm493, %v1141, 0
    %1157 = vmatprep.subr.mxu0 0.0
    %1158 = vmatpush1.msra.mxu0 0.0
    %1159 = vmatprep.subr.mxu0 0.0
    %1160 = vmatpush1.msra.mxu0 0.0
    %1161 = vmatprep.subr.mxu0 0.0
    %1162 = vmatpush1.msra.mxu0 0.0
    %1163 = vmatprep.subr.mxu0 0.0
    %1164 = vmatpush1.msra.mxu0 0.0
    %1165 = vmatprep.subr.mxu0 0.0
    %1166 = vmatpush1.msra.mxu0 0.0
    %1167 = vmatprep.subr.mxu0 0.0
    %1168 = vmatpush1.msra.mxu0 0.0
    %1169 = vmatprep.subr.mxu0 0.0
    %1170 = vmatpush1.msra.mxu0 0.0
    %1171 = vmatprep.subr.mxu0 0.0
    %1172 = vmatpush1.msra.mxu0 0.0
    %1173 = vmatprep.subr.mxu0 0.0
    %1174 = vmatpush1.msra.mxu0 0.0
    %1175 = vmatprep.subr.mxu0 0.0
    %1176 = vmatpush1.msra.mxu0 0.0
    %1177 = vmatprep.subr.mxu0 0.0
    %1178 = vmatpush1.msra.mxu0 0.0
    %1179 = vmatprep.subr.mxu0 0.0
    %1180 = vmatpush1.msra.mxu0 0.0
    %1181 = vmatprep.subr.mxu0 0.0
    %1182 = vmatpush1.msra.mxu0 %v1145
    %1183 = vmatprep.subr.mxu0 0.0
    %1184 = vmatpush1.msra.mxu0 %v1144
    %1185 = vmatprep.subr.mxu0 0.0
    %1186 = vmatpush1.msra.mxu0 %v1143
    %1187 = vmatprep.subr.mxu0 0.0
    %1188 = vmatpush1.msra.mxu0 %v1142
    %1189 = vmatprep.subr.mxu0 0.0
    %1190 = vmatpush2.msra.mxu0 0.0
    %1191 = vmatprep.subr.mxu0 0.0
    %1192 = vmatpush2.msra.mxu0 0.0
    %1193 = vmatprep.subr.mxu0 0.0
    %1194 = vmatpush2.msra.mxu0 0.0
    %1195 = vmatprep.subr.mxu0 0.0
    %1196 = vmatpush2.msra.mxu0 0.0
    %1197 = vmatprep.subr.mxu0 0.0
    %1198 = vmatpush2.msra.mxu0 0.0
    %1199 = vmatprep.subr.mxu0 0.0
    %1200 = vmatpush2.msra.mxu0 0.0
    %1201 = vmatprep.subr.mxu0 0.0
    %1202 = vmatpush2.msra.mxu0 0.0
    %1203 = vmatprep.subr.mxu0 0.0
    %1204 = vmatpush2.msra.mxu0 0.0
    %1205 = vmatprep.subr.mxu0 0.0
    %1206 = vmatpush2.msra.mxu0 0.0
    %1207 = vmatprep.subr.mxu0 0.0
    %1208 = vmatpush2.msra.mxu0 0.0
    %1209 = vmatprep.subr.mxu0 0.0
    %1210 = vmatpush2.msra.mxu0 0.0
    %1211 = vmatprep.subr.mxu0 0.0
    %1212 = vmatpush2.msra.mxu0 0.0
    %1213 = vmatprep.subr.mxu0 0.0
    %1214 = vmatpush2.msra.mxu0 0.0
    %1215 = vmatprep.subr.mxu0 0.0
    %1216 = vmatpush2.msra.mxu0 0.0
    %1217 = vmatprep.subr.mxu0 0.0
    %1218 = vmatpush2.msra.mxu0 0.0
    %1219 = vmatprep.subr.mxu0 0.0
    %1220 = vmatpush2.msra.mxu0 0.0
    %1221 = vmatprep.mubr.f32.mxu0 0.0
    %1222 = vmatmul.mubr.f32.gmra.mxu0 %v1152
    %v1223 = vpop.f32.mrf.mxu0
    %v1224 = vadd.f32 %v1150, %v1223
    %v1225 = vpop.f32.mrf.mxu0
    %1226 = vmatprep.mubr.f32.mxu0 0.0
    %1227 = vmatmul.mubr.f32.gmra.mxu0 %v1155
    %v1228 = vpop.f32.mrf.mxu0
    %v1229 = vadd.f32 %v1150, %v1228
    %v1230 = vpop.f32.mrf.mxu0
    %1231 = vdwg.mxu0
    %v1232 = vadd.f32 %v1224, %v618
    %v1233 = vadd.f32 %v1229, %v619
    %v1234 = vld [vmem:[%s3 + $0x5] sm:$0x1]
    %v1235 = vld [vmem:[%s3 + $0x6] sm:$0x1]
    %v1236 = vsel %vm493, %v1232, 0.0
    %1237 = vadd.xlane.f32.xlu0 %v1236
    %v1238 = vpop.xlane.xlu0 %1237
    %v1239 = vsel %vm493, %v1233, 0.0
    %1240 = vadd.xlane.f32.xlu0 %v1239
    %v1241 = vpop.xlane.xlu0 %1240
    %v1242 = vmul.f32 %v1238, %v587
    %v1243 = vmul.f32 %v1241, %v587
    %v1244 = vsub.f32 %v1232, %v1242
    %v1245 = vsub.f32 %v1233, %v1243
    %v1246 = vmul.f32 %v1244, %v1244
    %v1247 = vmul.f32 %v1245, %v1245
    %v1248 = vsel %vm493, %v1246, 0.0
    %1249 = vadd.xlane.f32.xlu0 %v1248
    %v1250 = vpop.xlane.xlu0 %1249
    %v1251 = vsel %vm493, %v1247, 0.0
    %1252 = vadd.xlane.f32.xlu0 %v1251
    %v1253 = vpop.xlane.xlu0 %1252
    %v1254 = vmul.f32 %v1250, %v587
    %v1255 = vmul.f32 %v1253, %v587
    %v1256 = vadd.f32 %v1254, 1e-12
    %v1257 = vadd.f32 %v1255, 1e-12
    %v1258 = vrsqrt.pop %v1256
    %v1259 = vrsqrt.pop %v1257
    %v1260 = vmul.f32 %v1244, %v1258
    %v1261 = vmul.f32 %v1245, %v1259
    %v1262 = vlaneseq
    %v1263 = vshrl.u32 %v1262, 7
    %v1264 = vsub.s32 0, %v1263
    %v1265 = vrot.slane %v1234, %v1264
    %v1266 = vmul.f32 %v1260, %v1265
    %v1267 = vmul.f32 %v1261, %v1265
    %v1268 = vlaneseq
    %v1269 = vshrl.u32 %v1268, 7
    %v1270 = vsub.s32 0, %v1269
    %v1271 = vrot.slane %v1235, %v1270
    %v1272 = vadd.f32 %v1266, %v1271
    %v1273 = vadd.f32 %v1267, %v1271
    %v1274 = vld [vmem:[#allocation2 + $0x60] sm:$0xff]
    %v1275 = vld [vmem:[#allocation2 + $0x68] sm:$0xff]
    %v1276 = vld [vmem:[#allocation2 + $0x70] sm:$0xff]
    %v1277 = vld [vmem:[#allocation2 + $0x78] sm:$0xff]
    %v1278 = vld [vmem:[%s3 + $0x7] sm:$0x1]
    %v1279 = vlaneseq
    %v1280 = vshrl.u32 %v1279, 7
    %v1281 = vsub.s32 0, %v1280
    %v1282 = vrot.slane %v1278, %v1281
    %v1284 = vsel %vm493, %v1272, 0
    %v1287 = vsel %vm493, %v1273, 0
    %1289 = vmatprep.subr.mxu0 0.0
    %1290 = vmatpush1.msra.mxu0 0.0
    %1291 = vmatprep.subr.mxu0 0.0
    %1292 = vmatpush1.msra.mxu0 0.0
    %1293 = vmatprep.subr.mxu0 0.0
    %1294 = vmatpush1.msra.mxu0 0.0
    %1295 = vmatprep.subr.mxu0 0.0
    %1296 = vmatpush1.msra.mxu0 0.0
    %1297 = vmatprep.subr.mxu0 0.0
    %1298 = vmatpush1.msra.mxu0 0.0
    %1299 = vmatprep.subr.mxu0 0.0
    %1300 = vmatpush1.msra.mxu0 0.0
    %1301 = vmatprep.subr.mxu0 0.0
    %1302 = vmatpush1.msra.mxu0 0.0
    %1303 = vmatprep.subr.mxu0 0.0
    %1304 = vmatpush1.msra.mxu0 0.0
    %1305 = vmatprep.subr.mxu0 0.0
    %1306 = vmatpush1.msra.mxu0 0.0
    %1307 = vmatprep.subr.mxu0 0.0
    %1308 = vmatpush1.msra.mxu0 0.0
    %1309 = vmatprep.subr.mxu0 0.0
    %1310 = vmatpush1.msra.mxu0 0.0
    %1311 = vmatprep.subr.mxu0 0.0
    %1312 = vmatpush1.msra.mxu0 0.0
    %1313 = vmatprep.subr.mxu0 0.0
    %1314 = vmatpush1.msra.mxu0 %v1277
    %1315 = vmatprep.subr.mxu0 0.0
    %1316 = vmatpush1.msra.mxu0 %v1276
    %1317 = vmatprep.subr.mxu0 0.0
    %1318 = vmatpush1.msra.mxu0 %v1275
    %1319 = vmatprep.subr.mxu0 0.0
    %1320 = vmatpush1.msra.mxu0 %v1274
    %1321 = vmatprep.subr.mxu0 0.0
    %1322 = vmatpush2.msra.mxu0 0.0
    %1323 = vmatprep.subr.mxu0 0.0
    %1324 = vmatpush2.msra.mxu0 0.0
    %1325 = vmatprep.subr.mxu0 0.0
    %1326 = vmatpush2.msra.mxu0 0.0
    %1327 = vmatprep.subr.mxu0 0.0
    %1328 = vmatpush2.msra.mxu0 0.0
    %1329 = vmatprep.subr.mxu0 0.0
    %1330 = vmatpush2.msra.mxu0 0.0
    %1331 = vmatprep.subr.mxu0 0.0
    %1332 = vmatpush2.msra.mxu0 0.0
    %1333 = vmatprep.subr.mxu0 0.0
    %1334 = vmatpush2.msra.mxu0 0.0
    %1335 = vmatprep.subr.mxu0 0.0
    %1336 = vmatpush2.msra.mxu0 0.0
    %1337 = vmatprep.subr.mxu0 0.0
    %1338 = vmatpush2.msra.mxu0 0.0
    %1339 = vmatprep.subr.mxu0 0.0
    %1340 = vmatpush2.msra.mxu0 0.0
    %1341 = vmatprep.subr.mxu0 0.0
    %1342 = vmatpush2.msra.mxu0 0.0
    %1343 = vmatprep.subr.mxu0 0.0
    %1344 = vmatpush2.msra.mxu0 0.0
    %1345 = vmatprep.subr.mxu0 0.0
    %1346 = vmatpush2.msra.mxu0 0.0
    %1347 = vmatprep.subr.mxu0 0.0
    %1348 = vmatpush2.msra.mxu0 0.0
    %1349 = vmatprep.subr.mxu0 0.0
    %1350 = vmatpush2.msra.mxu0 0.0
    %1351 = vmatprep.subr.mxu0 0.0
    %1352 = vmatpush2.msra.mxu0 0.0
    %1353 = vmatprep.mubr.f32.mxu0 0.0
    %1354 = vmatmul.mubr.f32.gmra.mxu0 %v1284
    %v1355 = vpop.f32.mrf.mxu0
    %v1356 = vadd.f32 %v1282, %v1355
    %v1357 = vpop.f32.mrf.mxu0
    %1358 = vmatprep.mubr.f32.mxu0 0.0
    %1359 = vmatmul.mubr.f32.gmra.mxu0 %v1287
    %v1360 = vpop.f32.mrf.mxu0
    %v1361 = vadd.f32 %v1282, %v1360
    %v1362 = vpop.f32.mrf.mxu0
    %1363 = vdwg.mxu0
    %v1364 = vmul.f32 %v1356, %v1356
    %v1365 = vmul.f32 %v1361, %v1361
    %v1366 = vmul.f32 %v1356, %v1364
    %v1367 = vmul.f32 %v1361, %v1365
    %v1368 = vmul.f32 %v1366, 0.044715
    %v1369 = vmul.f32 %v1367, 0.044715
    %v1370 = vadd.f32 %v1356, %v1368
    %v1371 = vadd.f32 %v1361, %v1369
    %v1372 = vmul.f32 %v1370, 0.7978846
    %v1373 = vmul.f32 %v1371, 0.7978846
    %v1374 = vtanh.pop %v1372
    %v1375 = vtanh.pop %v1373
    %v1376 = vadd.f32 %v1374, 1.0
    %v1377 = vadd.f32 %v1375, 1.0
    %v1378 = vmul.f32 %v1376, 0.5
    %v1379 = vmul.f32 %v1377, 0.5
    %v1380 = vmul.f32 %v1356, %v1378
    %v1381 = vmul.f32 %v1361, %v1379
    %v1382 = vld [vmem:[#allocation2 + $0x80] sm:$0xff]
    %v1383 = vld [vmem:[#allocation2 + $0x88] sm:$0xff]
    %v1384 = vld [vmem:[#allocation2 + $0x90] sm:$0xff]
    %v1385 = vld [vmem:[#allocation2 + $0x98] sm:$0xff]
    %v1386 = vld [vmem:[#allocation2 + $0xa0] sm:$0xff]
    %v1387 = vld [vmem:[#allocation2 + $0xa8] sm:$0xff]
    %v1388 = vld [vmem:[#allocation2 + $0xb0] sm:$0xff]
    %v1389 = vld [vmem:[#allocation2 + $0xb8] sm:$0xff]
    %v1390 = vld [vmem:[%s3 + $0x8] sm:$0x1]
    %v1391 = vlaneseq
    %v1392 = vshrl.u32 %v1391, 7
    %v1393 = vsub.s32 0, %v1392
    %v1394 = vrot.slane %v1390, %v1393
    %vm1395 = vcmask 523264
    %v1397 = vsel %vm1395, %v1380, 0
    %v1400 = vsel %vm1395, %v1381, 0
    %1402 = vmatprep.subr.mxu0 0.0
    %1403 = vmatpush1.msra.mxu0 0.0
    %1404 = vmatprep.subr.mxu0 0.0
    %1405 = vmatpush1.msra.mxu0 0.0
    %1406 = vmatprep.subr.mxu0 0.0
    %1407 = vmatpush1.msra.mxu0 0.0
    %1408 = vmatprep.subr.mxu0 0.0
    %1409 = vmatpush1.msra.mxu0 0.0
    %1410 = vmatprep.subr.mxu0 0.0
    %1411 = vmatpush1.msra.mxu0 0.0
    %1412 = vmatprep.subr.mxu0 0.0
    %1413 = vmatpush1.msra.mxu0 0.0
    %1414 = vmatprep.subr.mxu0 0.0
    %1415 = vmatpush1.msra.mxu0 0.0
    %1416 = vmatprep.subr.mxu0 0.0
    %1417 = vmatpush1.msra.mxu0 0.0
    %1418 = vmatprep.subr.mxu0 0.0
    %1419 = vmatpush1.msra.mxu0 %v1389
    %1420 = vmatprep.subr.mxu0 0.0
    %1421 = vmatpush1.msra.mxu0 %v1388
    %1422 = vmatprep.subr.mxu0 0.0
    %1423 = vmatpush1.msra.mxu0 %v1387
    %1424 = vmatprep.subr.mxu0 0.0
    %1425 = vmatpush1.msra.mxu0 %v1386
    %1426 = vmatprep.subr.mxu0 0.0
    %1427 = vmatpush1.msra.mxu0 %v1385
    %1428 = vmatprep.subr.mxu0 0.0
    %1429 = vmatpush1.msra.mxu0 %v1384
    %1430 = vmatprep.subr.mxu0 0.0
    %1431 = vmatpush1.msra.mxu0 %v1383
    %1432 = vmatprep.subr.mxu0 0.0
    %1433 = vmatpush1.msra.mxu0 %v1382
    %1434 = vmatprep.subr.mxu0 0.0
    %1435 = vmatpush2.msra.mxu0 0.0
    %1436 = vmatprep.subr.mxu0 0.0
    %1437 = vmatpush2.msra.mxu0 0.0
    %1438 = vmatprep.subr.mxu0 0.0
    %1439 = vmatpush2.msra.mxu0 0.0
    %1440 = vmatprep.subr.mxu0 0.0
    %1441 = vmatpush2.msra.mxu0 0.0
    %1442 = vmatprep.subr.mxu0 0.0
    %1443 = vmatpush2.msra.mxu0 0.0
    %1444 = vmatprep.subr.mxu0 0.0
    %1445 = vmatpush2.msra.mxu0 0.0
    %1446 = vmatprep.subr.mxu0 0.0
    %1447 = vmatpush2.msra.mxu0 0.0
    %1448 = vmatprep.subr.mxu0 0.0
    %1449 = vmatpush2.msra.mxu0 0.0
    %1450 = vmatprep.subr.mxu0 0.0
    %1451 = vmatpush2.msra.mxu0 0.0
    %1452 = vmatprep.subr.mxu0 0.0
    %1453 = vmatpush2.msra.mxu0 0.0
    %1454 = vmatprep.subr.mxu0 0.0
    %1455 = vmatpush2.msra.mxu0 0.0
    %1456 = vmatprep.subr.mxu0 0.0
    %1457 = vmatpush2.msra.mxu0 0.0
    %1458 = vmatprep.subr.mxu0 0.0
    %1459 = vmatpush2.msra.mxu0 0.0
    %1460 = vmatprep.subr.mxu0 0.0
    %1461 = vmatpush2.msra.mxu0 0.0
    %1462 = vmatprep.subr.mxu0 0.0
    %1463 = vmatpush2.msra.mxu0 0.0
    %1464 = vmatprep.subr.mxu0 0.0
    %1465 = vmatpush2.msra.mxu0 0.0
    %1466 = vmatprep.mubr.f32.mxu0 0.0
    %1467 = vmatmul.mubr.f32.gmra.mxu0 %v1397
    %v1468 = vpop.f32.mrf.mxu0
    %v1469 = vadd.f32 %v1394, %v1468
    %v1470 = vpop.f32.mrf.mxu0
    %1471 = vmatprep.mubr.f32.mxu0 0.0
    %1472 = vmatmul.mubr.f32.gmra.mxu0 %v1400
    %v1473 = vpop.f32.mrf.mxu0
    %v1474 = vadd.f32 %v1394, %v1473
    %v1475 = vpop.f32.mrf.mxu0
    %1476 = vdwg.mxu0
    %v1477 = vadd.f32 %v1469, %v1272
    %v1478 = vadd.f32 %v1474, %v1273
    %v1479 = vld [vmem:[%s3 + $0x9] sm:$0x1]
    %v1480 = vld [vmem:[%s3 + $0xa] sm:$0x1]
    %v1481 = vsel %vm493, %v1477, 0.0
    %1482 = vadd.xlane.f32.xlu0 %v1481
    %v1483 = vpop.xlane.xlu0 %1482
    %v1484 = vsel %vm493, %v1478, 0.0
    %1485 = vadd.xlane.f32.xlu0 %v1484
    %v1486 = vpop.xlane.xlu0 %1485
    %v1487 = vmul.f32 %v1483, %v587
    %v1488 = vmul.f32 %v1486, %v587
    %v1489 = vsub.f32 %v1477, %v1487
    %v1490 = vsub.f32 %v1478, %v1488
    %v1491 = vmul.f32 %v1489, %v1489
    %v1492 = vmul.f32 %v1490, %v1490
    %v1493 = vsel %vm493, %v1491, 0.0
    %1494 = vadd.xlane.f32.xlu0 %v1493
    %v1495 = vpop.xlane.xlu0 %1494
    %v1496 = vsel %vm493, %v1492, 0.0
    %1497 = vadd.xlane.f32.xlu0 %v1496
    %v1498 = vpop.xlane.xlu0 %1497
    %v1499 = vmul.f32 %v1495, %v587
    %v1500 = vmul.f32 %v1498, %v587
    %v1501 = vadd.f32 %v1499, 1e-12
    %v1502 = vadd.f32 %v1500, 1e-12
    %v1503 = vrsqrt.pop %v1501
    %v1504 = vrsqrt.pop %v1502
    %v1505 = vmul.f32 %v1489, %v1503
    %v1506 = vmul.f32 %v1490, %v1504
    %v1507 = vlaneseq
    %v1508 = vshrl.u32 %v1507, 7
    %v1509 = vsub.s32 0, %v1508
    %v1510 = vrot.slane %v1479, %v1509
    %v1511 = vmul.f32 %v1505, %v1510
    %v1512 = vmul.f32 %v1506, %v1510
    %v1513 = vlaneseq
    %v1514 = vshrl.u32 %v1513, 7
    %v1515 = vsub.s32 0, %v1514
    %v1516 = vrot.slane %v1480, %v1515
    %v1517 = vadd.f32 %v1511, %v1516
    %v1518 = vadd.f32 %v1512, %v1516
    %v1519 = vld [vmem:[%s3 + $0xe] sm:$0x3]
    %v1521 = vsel %vm731, %v1519, 0
    %1523 = vmatprep.subr.mxu0 0.0
    %1524 = vmatpush1.msra.mxu0 0.0
    %1525 = vmatprep.subr.mxu0 0.0
    %1526 = vmatpush1.msra.mxu0 0.0
    %1527 = vmatprep.subr.mxu0 0.0
    %1528 = vmatpush1.msra.mxu0 0.0
    %1529 = vmatprep.subr.mxu0 0.0
    %1530 = vmatpush1.msra.mxu0 0.0
    %1531 = vmatprep.subr.mxu0 0.0
    %1532 = vmatpush1.msra.mxu0 0.0
    %1533 = vmatprep.subr.mxu0 0.0
    %1534 = vmatpush1.msra.mxu0 0.0
    %1535 = vmatprep.subr.mxu0 0.0
    %1536 = vmatpush1.msra.mxu0 0.0
    %1537 = vmatprep.subr.mxu0 0.0
    %1538 = vmatpush1.msra.mxu0 0.0
    %1539 = vmatprep.subr.mxu0 0.0
    %1540 = vmatpush1.msra.mxu0 0.0
    %1541 = vmatprep.subr.mxu0 0.0
    %1542 = vmatpush1.msra.mxu0 0.0
    %1543 = vmatprep.subr.mxu0 0.0
    %1544 = vmatpush1.msra.mxu0 0.0
    %1545 = vmatprep.subr.mxu0 0.0
    %1546 = vmatpush1.msra.mxu0 0.0
    %1547 = vmatprep.subr.mxu0 0.0
    %1548 = vmatpush1.msra.mxu0 0.0
    %1549 = vmatprep.subr.mxu0 0.0
    %1550 = vmatpush1.msra.mxu0 0.0
    %1551 = vmatprep.subr.mxu0 0.0
    %1552 = vmatpush1.msra.mxu0 %v1518
    %1553 = vmatprep.subr.mxu0 0.0
    %1554 = vmatpush1.msra.mxu0 %v1517
    %1555 = vmatprep.subr.mxu0 0.0
    %1556 = vmatpush2.msra.mxu0 0.0
    %1557 = vmatprep.subr.mxu0 0.0
    %1558 = vmatpush2.msra.mxu0 0.0
    %1559 = vmatprep.subr.mxu0 0.0
    %1560 = vmatpush2.msra.mxu0 0.0
    %1561 = vmatprep.subr.mxu0 0.0
    %1562 = vmatpush2.msra.mxu0 0.0
    %1563 = vmatprep.subr.mxu0 0.0
    %1564 = vmatpush2.msra.mxu0 0.0
    %1565 = vmatprep.subr.mxu0 0.0
    %1566 = vmatpush2.msra.mxu0 0.0
    %1567 = vmatprep.subr.mxu0 0.0
    %1568 = vmatpush2.msra.mxu0 0.0
    %1569 = vmatprep.subr.mxu0 0.0
    %1570 = vmatpush2.msra.mxu0 0.0
    %1571 = vmatprep.subr.mxu0 0.0
    %1572 = vmatpush2.msra.mxu0 0.0
    %1573 = vmatprep.subr.mxu0 0.0
    %1574 = vmatpush2.msra.mxu0 0.0
    %1575 = vmatprep.subr.mxu0 0.0
    %1576 = vmatpush2.msra.mxu0 0.0
    %1577 = vmatprep.subr.mxu0 0.0
    %1578 = vmatpush2.msra.mxu0 0.0
    %1579 = vmatprep.subr.mxu0 0.0
    %1580 = vmatpush2.msra.mxu0 0.0
    %1581 = vmatprep.subr.mxu0 0.0
    %1582 = vmatpush2.msra.mxu0 0.0
    %1583 = vmatprep.subr.mxu0 0.0
    %1584 = vmatpush2.msra.mxu0 0.0
    %1585 = vmatprep.subr.mxu0 0.0
    %1586 = vmatpush2.msra.mxu0 0.0
    %1587 = vmatprep.mubr.f32.mxu0 0.0
    %1588 = vmatmul.mubr.f32.gmra.mxu0 %v1521
    %v1589 = vpop.f32.mrf.mxu0
    %v1590 = vadd.f32 0.0, %v1589
    %v1591 = vpop.f32.mrf.mxu0
    %1592 = vdwg.mxu0
    %v1593 = vld [vmem:[#allocation2 + $0xc0] sm:$0xff]
    %v1594 = vld [vmem:[#allocation2 + $0xc8] sm:$0xff]
    %v1595 = vld [vmem:[#allocation2 + $0xd0] sm:$0xff]
    %v1596 = vld [vmem:[#allocation2 + $0xd8] sm:$0xff]
    %v1597 = vld [vmem:[%s3 + $0xb] sm:$0x1]
    %v1598 = vlaneseq
    %v1599 = vshrl.u32 %v1598, 7
    %v1600 = vsub.s32 0, %v1599
    %v1601 = vrot.slane %v1597, %v1600
    %v1603 = vsel %vm493, %v1590, 0
    %1605 = vmatprep.subr.mxu0 0.0
    %1606 = vmatpush1.msra.mxu0 0.0
    %1607 = vmatprep.subr.mxu0 0.0
    %1608 = vmatpush1.msra.mxu0 0.0
    %1609 = vmatprep.subr.mxu0 0.0
    %1610 = vmatpush1.msra.mxu0 0.0
    %1611 = vmatprep.subr.mxu0 0.0
    %1612 = vmatpush1.msra.mxu0 0.0
    %1613 = vmatprep.subr.mxu0 0.0
    %1614 = vmatpush1.msra.mxu0 0.0
    %1615 = vmatprep.subr.mxu0 0.0
    %1616 = vmatpush1.msra.mxu0 0.0
    %1617 = vmatprep.subr.mxu0 0.0
    %1618 = vmatpush1.msra.mxu0 0.0
    %1619 = vmatprep.subr.mxu0 0.0
    %1620 = vmatpush1.msra.mxu0 0.0
    %1621 = vmatprep.subr.mxu0 0.0
    %1622 = vmatpush1.msra.mxu0 0.0
    %1623 = vmatprep.subr.mxu0 0.0
    %1624 = vmatpush1.msra.mxu0 0.0
    %1625 = vmatprep.subr.mxu0 0.0
    %1626 = vmatpush1.msra.mxu0 0.0
    %1627 = vmatprep.subr.mxu0 0.0
    %1628 = vmatpush1.msra.mxu0 0.0
    %1629 = vmatprep.subr.mxu0 0.0
    %1630 = vmatpush1.msra.mxu0 %v1596
    %1631 = vmatprep.subr.mxu0 0.0
    %1632 = vmatpush1.msra.mxu0 %v1595
    %1633 = vmatprep.subr.mxu0 0.0
    %1634 = vmatpush1.msra.mxu0 %v1594
    %1635 = vmatprep.subr.mxu0 0.0
    %1636 = vmatpush1.msra.mxu0 %v1593
    %1637 = vmatprep.subr.mxu0 0.0
    %1638 = vmatpush2.msra.mxu0 0.0
    %1639 = vmatprep.subr.mxu0 0.0
    %1640 = vmatpush2.msra.mxu0 0.0
    %1641 = vmatprep.subr.mxu0 0.0
    %1642 = vmatpush2.msra.mxu0 0.0
    %1643 = vmatprep.subr.mxu0 0.0
    %1644 = vmatpush2.msra.mxu0 0.0
    %1645 = vmatprep.subr.mxu0 0.0
    %1646 = vmatpush2.msra.mxu0 0.0
    %1647 = vmatprep.subr.mxu0 0.0
    %1648 = vmatpush2.msra.mxu0 0.0
    %1649 = vmatprep.subr.mxu0 0.0
    %1650 = vmatpush2.msra.mxu0 0.0
    %1651 = vmatprep.subr.mxu0 0.0
    %1652 = vmatpush2.msra.mxu0 0.0
    %1653 = vmatprep.subr.mxu0 0.0
    %1654 = vmatpush2.msra.mxu0 0.0
    %1655 = vmatprep.subr.mxu0 0.0
    %1656 = vmatpush2.msra.mxu0 0.0
    %1657 = vmatprep.subr.mxu0 0.0
    %1658 = vmatpush2.msra.mxu0 0.0
    %1659 = vmatprep.subr.mxu0 0.0
    %1660 = vmatpush2.msra.mxu0 0.0
    %1661 = vmatprep.subr.mxu0 0.0
    %1662 = vmatpush2.msra.mxu0 0.0
    %1663 = vmatprep.subr.mxu0 0.0
    %1664 = vmatpush2.msra.mxu0 0.0
    %1665 = vmatprep.subr.mxu0 0.0
    %1666 = vmatpush2.msra.mxu0 0.0
    %1667 = vmatprep.subr.mxu0 0.0
    %1668 = vmatpush2.msra.mxu0 0.0
    %1669 = vmatprep.mubr.f32.mxu0 0.0
    %1670 = vmatmul.mubr.f32.gmra.mxu0 %v1603
    %v1671 = vpop.f32.mrf.mxu0
    %v1672 = vadd.f32 %v1601, %v1671
    %v1673 = vpop.f32.mrf.mxu0
    %1674 = vdwg.mxu0
    %v1675 = vmul.f32 %v1672, %v1672
    %v1676 = vmul.f32 %v1672, %v1675
    %v1677 = vmul.f32 %v1676, 0.044715
    %v1678 = vadd.f32 %v1672, %v1677
    %v1679 = vmul.f32 %v1678, 0.7978846
    %v1680 = vtanh.pop %v1679
    %v1681 = vadd.f32 %v1680, 1.0
    %v1682 = vmul.f32 %v1681, 0.5
    %v1683 = vmul.f32 %v1672, %v1682
    %v1684 = vld [vmem:[#allocation2 + $0xe0] sm:$0xff]
    %v1685 = vld [vmem:[#allocation2 + $0xe8] sm:$0xff]
    %v1686 = vld [vmem:[#allocation2 + $0xf0] sm:$0xff]
    %v1687 = vld [vmem:[#allocation2 + $0xf8] sm:$0xff]
    %v1688 = vld [vmem:[%s3 + $0xc] sm:$0x1]
    %v1689 = vlaneseq
    %v1690 = vshrl.u32 %v1689, 7
    %v1691 = vsub.s32 0, %v1690
    %v1692 = vrot.slane %v1688, %v1691
    %v1694 = vsel %vm493, %v1683, 0
    %1696 = vmatprep.subr.mxu0 0.0
    %1697 = vmatpush1.msra.mxu0 0.0
    %1698 = vmatprep.subr.mxu0 0.0
    %1699 = vmatpush1.msra.mxu0 0.0
    %1700 = vmatprep.subr.mxu0 0.0
    %1701 = vmatpush1.msra.mxu0 0.0
    %1702 = vmatprep.subr.mxu0 0.0
    %1703 = vmatpush1.msra.mxu0 0.0
    %1704 = vmatprep.subr.mxu0 0.0
    %1705 = vmatpush1.msra.mxu0 0.0
    %1706 = vmatprep.subr.mxu0 0.0
    %1707 = vmatpush1.msra.mxu0 0.0
    %1708 = vmatprep.subr.mxu0 0.0
    %1709 = vmatpush1.msra.mxu0 0.0
    %1710 = vmatprep.subr.mxu0 0.0
    %1711 = vmatpush1.msra.mxu0 0.0
    %1712 = vmatprep.subr.mxu0 0.0
    %1713 = vmatpush1.msra.mxu0 0.0
    %1714 = vmatprep.subr.mxu0 0.0
    %1715 = vmatpush1.msra.mxu0 0.0
    %1716 = vmatprep.subr.mxu0 0.0
    %1717 = vmatpush1.msra.mxu0 0.0
    %1718 = vmatprep.subr.mxu0 0.0
    %1719 = vmatpush1.msra.mxu0 0.0
    %1720 = vmatprep.subr.mxu0 0.0
    %1721 = vmatpush1.msra.mxu0 %v1687
    %1722 = vmatprep.subr.mxu0 0.0
    %1723 = vmatpush1.msra.mxu0 %v1686
    %1724 = vmatprep.subr.mxu0 0.0
    %1725 = vmatpush1.msra.mxu0 %v1685
    %1726 = vmatprep.subr.mxu0 0.0
    %1727 = vmatpush1.msra.mxu0 %v1684
    %1728 = vmatprep.subr.mxu0 0.0
    %1729 = vmatpush2.msra.mxu0 0.0
    %1730 = vmatprep.subr.mxu0 0.0
    %1731 = vmatpush2.msra.mxu0 0.0
    %1732 = vmatprep.subr.mxu0 0.0
    %1733 = vmatpush2.msra.mxu0 0.0
    %1734 = vmatprep.subr.mxu0 0.0
    %1735 = vmatpush2.msra.mxu0 0.0
    %1736 = vmatprep.subr.mxu0 0.0
    %1737 = vmatpush2.msra.mxu0 0.0
    %1738 = vmatprep.subr.mxu0 0.0
    %1739 = vmatpush2.msra.mxu0 0.0
    %1740 = vmatprep.subr.mxu0 0.0
    %1741 = vmatpush2.msra.mxu0 0.0
    %1742 = vmatprep.subr.mxu0 0.0
    %1743 = vmatpush2.msra.mxu0 0.0
    %1744 = vmatprep.subr.mxu0 0.0
    %1745 = vmatpush2.msra.mxu0 0.0
    %1746 = vmatprep.subr.mxu0 0.0
    %1747 = vmatpush2.msra.mxu0 0.0
    %1748 = vmatprep.subr.mxu0 0.0
    %1749 = vmatpush2.msra.mxu0 0.0
    %1750 = vmatprep.subr.mxu0 0.0
    %1751 = vmatpush2.msra.mxu0 0.0
    %1752 = vmatprep.subr.mxu0 0.0
    %1753 = vmatpush2.msra.mxu0 0.0
    %1754 = vmatprep.subr.mxu0 0.0
    %1755 = vmatpush2.msra.mxu0 0.0
    %1756 = vmatprep.subr.mxu0 0.0
    %1757 = vmatpush2.msra.mxu0 0.0
    %1758 = vmatprep.subr.mxu0 0.0
    %1759 = vmatpush2.msra.mxu0 0.0
    %1760 = vmatprep.mubr.f32.mxu0 0.0
    %1761 = vmatmul.mubr.f32.gmra.mxu0 %v1694
    %v1762 = vpop.f32.mrf.mxu0
    %v1763 = vadd.f32 %v1692, %v1762
    %v1764 = vpop.f32.mrf.mxu0
    %1765 = vdwg.mxu0
    %vm1766 = vcmask 9216
    %v1767 = vsel %vm1766, %v1763, -inf
    %1768 = vmax.xlane.f32.xlu0 %v1767
    %v1769 = vpop.xlane.xlu0 %1768
    %v1770 = vsub.f32 %v1763, %v1769
    %v1771 = vmul.f32 %v1770, 1.442695
    %v1772 = vpow.pop %v1771
    %v1773 = vsel %vm1766, %v1772, 0.0
    %1774 = vadd.xlane.f32.xlu0 %v1773
    %v1775 = vpop.xlane.xlu0 %1774
    %v1776 = vrcp.pop %v1775
    %v1777 = vmul.f32 %v1772, %v1776
    %v1778 = vlog2.pop %v1775
    %v1779 = vmul.f32 %v1778, 0.6931472
    %v1780 = vsub.f32 %v1770, %v1779
    %1782 = vset.pattern.permute.xlu0 2
    %1783 = vperm.xlu0 %1782, %v33
    %v1784 = vpop.permute.xlu0 %1783
    %vm1786 = vcmp.eq.f32.partialorder %v1784, %v36
    %v1787 = vsel %vm1786, 1, 0
    %v1788 = vcvt.s32.f32 %v1787
    %v1789 = vmul.f32 %v1788, %v1780
    %v1790 = vsel %vm1766, %v1789, 0.0
    %1791 = vadd.xlane.f32.xlu0 %v1790
    %v1792 = vpop.xlane.xlu0 %1791
    %v1793 = vsub.f32 0.0, %v1792
    %vm1794 = vcmask 1024
    %v1795 = vsel %vm1794, %v1793, 0.0
    %1796 = vadd.xlane.f32.xlu0 %v1795
    %v1797 = vpop.xlane.xlu0 %1796
    %v1798 = vrot.slane %v1797, 4
    %v1799 = vadd.f32 %v1797, %v1798
    %v1800 = vrot.slane %v1799, 2
    %v1801 = vadd.f32 %v1799, %v1800
    %v1802 = vrot.slane %v1801, 1
    %v1803 = vadd.f32 %v1801, %v1802
    %s1804 = vtos %v1803
    %v1805 = vstv %s1804
    %v1806 = vrcp.pop 2.0
    %v1807 = vmul.f32 %v1805, %v1806
    %vm1808 = vcmask 15360
    %v1809 = vsel %vm1808, %v1777, %v1807
    %vm1810 = vcmask 25600
    %1811 = vst.msk [vmem:[%s4] sm:$0x3] %vm1810, %v1809
    // Predicated region
    $region22: #{electra_discriminator_forward.1} parent=1 // pred_check
      _
    $region23: #{electra_discriminator_forward.1} parent=1 // pred_check_branch
      %1813 = sbr.rel (0) target = $region25
    $region24: #{electra_discriminator_forward.1} parent=1 // pred_region
      _
    $region25: #{electra_discriminator_forward.1} parent=1 // pred_fallthru
      _
    // Predicated region
    $region26: #{electra_discriminator_forward.1} parent=1 // pred_check
      _
    $region27: #{electra_discriminator_forward.1} parent=1 // pred_check_branch
      %1815 = sbr.rel (0) target = $region29
    $region28: #{electra_discriminator_forward.1} parent=1 // pred_region
      _
    $region29: #{electra_discriminator_forward.1} parent=1 // pred_fallthru
      _
    %1816 = vsyncpa [#allocation3], 1

</llo_original>
